<compile_context>
chip_gen: v7x
topology: tpu7x:2x2x1
jax: 0.10.0
libtpu: 0.0.40
codegen_flags: <defaults>
</compile_context>

<pallas_src>
import functools

import jax
import jax.numpy as jnp
from jax.experimental import pallas as pl
from jax.experimental.pallas import tpu as pltpu

# ----------------------------------------------------------------------------
# Model hyper-parameters (small, consistent with the PyTorch module structure;
# the real script uses image_size=256 -- shrunk here for a runnable demo).
# ----------------------------------------------------------------------------
IMAGE_SIZE = 16
IMAGE_CHANNELS = 1
Z_DIM = 20
ENC_CH = 32
FEAT = ENC_CH * (IMAGE_SIZE // 4) * (IMAGE_SIZE // 4)

VMEM_LIMIT_BYTES = 32 * 1024 * 1024   # safe on all generations; tiles << this


def _round_up(x, m):
    return (x + m - 1) // m * m


# ----------------------------------------------------------------------------
# Pallas kernel 1: tiled  act(A @ W + b)
# ----------------------------------------------------------------------------
def _matmul_bias_act_kernel(a_ref, w_ref, b_ref, o_ref, acc_ref, *, act):
    @pl.when(pl.program_id(2) == 0)
    def _init():
        acc_ref[...] = jnp.zeros_like(acc_ref)

    acc_ref[...] += jnp.dot(a_ref[...], w_ref[...],
                            preferred_element_type=jnp.float32)

    @pl.when(pl.program_id(2) == pl.num_programs(2) - 1)
    def _epilogue():
        out = acc_ref[...] + b_ref[...]
        if act == "relu":
            out = jnp.maximum(out, 0.0)
        elif act == "sigmoid":
            out = jax.nn.sigmoid(out)
        o_ref[...] = out.astype(o_ref.dtype)


def matmul_bias_act(a, w_t, b, act="none"):
    """a: [M, K] f32, w_t: [K, N] f32, b: [N] f32 -> [M, N] f32.

    MXU inputs are cast to bf16; accumulation, bias and activation are f32.
    Tiled over (M, N, K) with padding to tile multiples (padded rows/cols are
    sliced off, padded K contributes exact zeros).
    """
    M, K = a.shape
    K2, N = w_t.shape
    assert K == K2

    # ---- tile sizes (generation-safe: well under 32 MiB scoped VMEM) -------
    tm = min(512, _round_up(M, 8))
    Mp = _round_up(M, tm)
    if K > 2048:
        tk = 1024
        Kp = _round_up(K, tk)
    else:
        tk, Kp = K, K
    if N > 2048:
        tn = 512
        Np = _round_up(N, tn)
    else:
        tn, Np = N, N

    a_p = a if (Mp, Kp) == (M, K) else jnp.pad(a, ((0, Mp - M), (0, Kp - K)))
    w_p = w_t if (Kp, Np) == (K, N) else jnp.pad(w_t, ((0, Kp - K), (0, Np - N)))
    b_p = b if Np == N else jnp.pad(b, (0, Np - N))

    a_bf = a_p.astype(jnp.bfloat16)
    w_bf = w_p.astype(jnp.bfloat16)
    b2 = b_p.reshape(1, Np).astype(jnp.float32)

    grid = (Mp // tm, Np // tn, Kp // tk)
    cost = pl.CostEstimate(
        flops=2 * Mp * Np * Kp,
        transcendentals=(Mp * Np if act == "sigmoid" else 0),
        bytes_accessed=(Mp * Kp + Kp * Np) * 2 + (Np + Mp * Np) * 4,
    )

    out = pl.pallas_call(
        functools.partial(_matmul_bias_act_kernel, act=act),
        out_shape=jax.ShapeDtypeStruct((Mp, Np), jnp.float32),
        grid_spec=pltpu.PrefetchScalarGridSpec(
            num_scalar_prefetch=0,
            grid=grid,
            in_specs=[
                pl.BlockSpec((tm, tk), lambda i, j, k: (i, k)),
                pl.BlockSpec((tk, tn), lambda i, j, k: (k, j)),
                pl.BlockSpec((1, tn), lambda i, j, k: (0, j)),
            ],
            out_specs=pl.BlockSpec((tm, tn), lambda i, j, k: (i, j)),
            scratch_shapes=[pltpu.VMEM((tm, tn), jnp.float32)],
        ),
        compiler_params=pltpu.CompilerParams(
            dimension_semantics=("parallel", "parallel", "arbitrary"),
            vmem_limit_bytes=VMEM_LIMIT_BYTES,
        ),
        cost_estimate=cost,
    )(a_bf, w_bf, b2)

    if (Mp, Np) != (M, N):
        out = out[:M, :N]
    return out


# ----------------------------------------------------------------------------
# Pallas kernel 2: fused latent heads (fc1 & fc2 in one matmul) + reparam
# ----------------------------------------------------------------------------
def _heads_reparam_kernel(h_ref, w_ref, b_ref, eps_ref, ml_ref, z_ref, acc_ref,
                          *, zdim):
    k = pl.program_id(0)

    @pl.when(k == 0)
    def _init():
        acc_ref[...] = jnp.zeros_like(acc_ref)

    acc_ref[...] += jnp.dot(h_ref[...], w_ref[...],
                            preferred_element_type=jnp.float32)

    @pl.when(k == pl.num_programs(0) - 1)
    def _epilogue():
        ml = acc_ref[...] + b_ref[...]          # [B, 2*zdim] = [mu | logvar]
        mu = ml[:, :zdim]
        logvar = ml[:, zdim:]
        ml_ref[...] = ml
        z_ref[...] = mu + eps_ref[...] * jnp.exp(0.5 * logvar)


def heads_and_reparam(h, w_heads_t, b_heads, eps):
    """h: [B, FEAT], w_heads_t: [FEAT, 2Z] (= [fc1 | fc2] cols), b_heads: [2Z],
    eps: [B, Z].  Returns (mu, logvar, z)."""
    Bsz, K = h.shape
    two_z = w_heads_t.shape[1]
    zdim = two_z // 2

    if K > 2048:
        tk = 2048
        Kp = _round_up(K, tk)
        h = jnp.pad(h, ((0, 0), (0, Kp - K)))
        w_heads_t = jnp.pad(w_heads_t, ((0, Kp - K), (0, 0)))
    else:
        tk, Kp = K, K

    cost = pl.CostEstimate(
        flops=2 * Bsz * Kp * two_z,
        transcendentals=Bsz * zdim,
        bytes_accessed=(Bsz * Kp + Kp * two_z) * 2
        + (two_z + Bsz * two_z + 2 * Bsz * zdim) * 4,
    )

    ml, z = pl.pallas_call(
        functools.partial(_heads_reparam_kernel, zdim=zdim),
        out_shape=(jax.ShapeDtypeStruct((Bsz, two_z), jnp.float32),
                   jax.ShapeDtypeStruct((Bsz, zdim), jnp.float32)),
        grid_spec=pltpu.PrefetchScalarGridSpec(
            num_scalar_prefetch=0,
            grid=(Kp // tk,),
            in_specs=[
                pl.BlockSpec((Bsz, tk), lambda k: (0, k)),
                pl.BlockSpec((tk, two_z), lambda k: (k, 0)),
                pl.BlockSpec((1, two_z), lambda k: (0, 0)),
                pl.BlockSpec((Bsz, zdim), lambda k: (0, 0)),
            ],
            out_specs=(pl.BlockSpec((Bsz, two_z), lambda k: (0, 0)),
                       pl.BlockSpec((Bsz, zdim), lambda k: (0, 0))),
            scratch_shapes=[pltpu.VMEM((Bsz, two_z), jnp.float32)],
        ),
        compiler_params=pltpu.CompilerParams(
            dimension_semantics=("arbitrary",),
            vmem_limit_bytes=VMEM_LIMIT_BYTES,
        ),
        cost_estimate=cost,
    )(h.astype(jnp.bfloat16), w_heads_t.astype(jnp.bfloat16),
      b_heads.reshape(1, two_z).astype(jnp.float32),
      eps.astype(jnp.float32))

    return ml[:, :zdim], ml[:, zdim:], z


# ----------------------------------------------------------------------------
# Conv / ConvTranspose wrappers (NHWC; im2col glue in JAX, matmul in Pallas)
# ----------------------------------------------------------------------------
def _im2col_nhwc(x, kh, kw, stride, pad):
    """x: [B, H, W, C] -> patches [B*Ho*Wo, kh*kw*C] (flat index (i, j, c))."""
    B, H, W, C = x.shape
    Ho = (H + 2 * pad - kh) // stride + 1
    Wo = (W + 2 * pad - kw) // stride + 1
    xp = jnp.pad(x, ((0, 0), (pad, pad), (pad, pad), (0, 0)))
    cols = []
    for i in range(kh):
        for j in range(kw):
            cols.append(xp[:, i:i + stride * Ho:stride,
                           j:j + stride * Wo:stride, :])
    p = jnp.concatenate(cols, axis=-1)        # [B, Ho, Wo, kh*kw*C]
    return p.reshape(B * Ho * Wo, kh * kw * C), Ho, Wo


def conv2d_nhwc(x, w, b, stride, pad, act):
    """PyTorch-semantics Conv2d on NHWC activations. w: [Cout, Cin, kh, kw]."""
    Cout, Cin, kh, kw = w.shape
    B = x.shape[0]
    patches, Ho, Wo = _im2col_nhwc(x, kh, kw, stride, pad)
    w_mat = w.transpose(2, 3, 1, 0).reshape(kh * kw * Cin, Cout)   # (i,j,c)-major
    y = matmul_bias_act(patches, w_mat, b, act)                    # Pallas MXU
    return y.reshape(B, Ho, Wo, Cout)


def _conv_transpose_equiv_weight(w):
    """ConvTranspose2d(k=4, s=2, p=1) == stride-1 3x3 conv with 4 output phases.

    w: [Cin, Cout, 4, 4] (PyTorch ConvTranspose2d layout).
    Returns equivalent conv weight [4*Cout, Cin, 3, 3] (phase-major channels).
    out[2p+ry, 2q+rx, co] = sum_{ci,dy,dx} x[p+dy, q+dx, ci] * w[ci,co,ky,kx]
    with ky = 1+ry-2*dy, kx = 1+rx-2*dx (zero where out of kernel range).
    """
    Cin, Cout, kh, kw = w.shape
    w_eq = jnp.zeros((2, 2, Cout, Cin, 3, 3), w.dtype)
    for ry in range(2):
        for rx in range(2):
            for dy in (-1, 0, 1):
                ky = 1 + ry - 2 * dy
                if not 0 <= ky < kh:
                    continue
                for dx in (-1, 0, 1):
                    kx = 1 + rx - 2 * dx
                    if not 0 <= kx < kw:
                        continue
                    w_eq = w_eq.at[ry, rx, :, :, dy + 1, dx + 1].set(
                        w[:, :, ky, kx].T)
    return w_eq.reshape(4 * Cout, Cin, 3, 3)


def conv_transpose2d_nhwc(x, w, b, act):
    """PyTorch-semantics ConvTranspose2d(k=4, stride=2, pad=1) on NHWC input."""
    Cin, Cout = w.shape[0], w.shape[1]
    B, H, W, _ = x.shape
    w_comb = _conv_transpose_equiv_weight(w)       # [4*Cout, Cin, 3, 3]
    b_comb = jnp.tile(b, 4)                        # phase-major bias
    y = conv2d_nhwc(x, w_comb, b_comb, stride=1, pad=1, act=act)  # [B,H,W,4*Cout]
    y = y.reshape(B, H, W, 2, 2, Cout).transpose(0, 1, 3, 2, 4, 5)
    return y.reshape(B, 2 * H, 2 * W, Cout)


# ----------------------------------------------------------------------------
# Parameters (PyTorch layouts; shapes follow ConvVAE.__init__)
# ----------------------------------------------------------------------------
def init_params(key):
    ks = jax.random.split(key, 14)

    def n(k, shape, scale=0.05):
        return (scale * jax.random.normal(k, shape)).astype(jnp.float32)

    return {
        # encoder
        "conv1_w": n(ks[0], (16, IMAGE_CHANNELS, 4, 4)),
        "conv1_b": n(ks[1], (16,)),
        "conv2_w": n(ks[2], (ENC_CH, 16, 4, 4)),
        "conv2_b": n(ks[3], (ENC_CH,)),
        # latent heads
        "fc1_w": n(ks[4], (Z_DIM, FEAT)),
        "fc1_b": n(ks[5], (Z_DIM,)),
        "fc2_w": n(ks[6], (Z_DIM, FEAT)),
        "fc2_b": n(ks[7], (Z_DIM,)),
        "fc3_w": n(ks[8], (FEAT, Z_DIM)),
        "fc3_b": n(ks[9], (FEAT,)),
        # decoder (ConvTranspose2d weight layout: [Cin, Cout, kh, kw])
        "convT1_w": n(ks[10], (ENC_CH, 16, 4, 4)),
        "convT1_b": n(ks[11], (16,)),
        "convT2_w": n(ks[12], (16, IMAGE_CHANNELS, 4, 4)),
        "convT2_b": n(ks[13], (IMAGE_CHANNELS,)),
    }


# ----------------------------------------------------------------------------
# ConvVAE forward (x: NCHW at the boundary, matching PyTorch)
# ----------------------------------------------------------------------------
def conv_vae_forward(params, x, eps):
    B = x.shape[0]
    Hq = Wq = IMAGE_SIZE // 4

    # boundary: NCHW -> NHWC (single conversion; NHWC end-to-end inside)
    h = jnp.transpose(x, (0, 2, 3, 1))

    # encoder
    h = conv2d_nhwc(h, params["conv1_w"], params["conv1_b"], 2, 1, "relu")
    h = conv2d_nhwc(h, params["conv2_w"], params["conv2_b"], 2, 1, "relu")
    h = h.reshape(B, -1)                       # NHWC flatten

    # permute FC weights once so the NHWC flatten matches nn.Flatten (NCHW)
    def _enc_head_wt(w):                       # [Z, FEAT_nchw] -> [FEAT_nhwc, Z]
        return w.reshape(-1, ENC_CH, Hq, Wq).transpose(2, 3, 1, 0).reshape(FEAT, -1)

    w_heads = jnp.concatenate([_enc_head_wt(params["fc1_w"]),
                               _enc_head_wt(params["fc2_w"])], axis=1)
    b_heads = jnp.concatenate([params["fc1_b"], params["fc2_b"]])

    # fused fc1 + fc2 + reparameterization (eps supplied externally)
    mu, logvar, z = heads_and_reparam(h, w_heads, b_heads, eps)

    # fc3 with NHWC-permuted output columns, then unflatten to NHWC image
    w3_t = (params["fc3_w"].T.reshape(-1, ENC_CH, Hq, Wq)
            .transpose(0, 2, 3, 1).reshape(-1, FEAT))
    b3 = params["fc3_b"].reshape(ENC_CH, Hq, Wq).transpose(1, 2, 0).reshape(FEAT)
    d = matmul_bias_act(z, w3_t, b3, "none").reshape(B, Hq, Wq, ENC_CH)

    # decoder
    d = conv_transpose2d_nhwc(d, params["convT1_w"], params["convT1_b"], "relu")
    x_recon = conv_transpose2d_nhwc(d, params["convT2_w"], params["convT2_b"],
                                    "sigmoid")

    # boundary: NHWC -> NCHW
    return jnp.transpose(x_recon, (0, 3, 1, 2)), mu, logvar


# ----------------------------------------------------------------------------
if __name__ == "__main__":
    key = jax.random.PRNGKey(0)
    k_x, k_p, k_eps = jax.random.split(key, 3)

    batch = 2
    x = jax.random.normal(k_x, (batch, IMAGE_CHANNELS, IMAGE_SIZE, IMAGE_SIZE),
                          dtype=jnp.float32)
    params = init_params(k_p)
    eps = jax.random.normal(k_eps, (batch, Z_DIM), dtype=jnp.float32)

    fwd = jax.jit(conv_vae_forward)
    x_recon, mu, logvar = fwd(params, x, eps)
    jax.block_until_ready((x_recon, mu, logvar))

    assert x_recon.shape == (batch, IMAGE_CHANNELS, IMAGE_SIZE, IMAGE_SIZE)
    assert mu.shape == (batch, Z_DIM) and logvar.shape == (batch, Z_DIM)
    assert bool(jnp.all(jnp.isfinite(x_recon)))
    assert bool(jnp.all(jnp.isfinite(mu))) and bool(jnp.all(jnp.isfinite(logvar)))
    print("KERNEL_OK")
</pallas_src>

<mosaic_0001>
module attributes {stable_mosaic.version = 11 : i64} {
  func.func @_matmul_bias_act_kernel(%arg0: i32, %arg1: i32, %arg2: i32, %arg3: memref<128x16xbf16, #tpu.memory_space<vmem>>, %arg4: memref<16x16xbf16, #tpu.memory_space<vmem>>, %arg5: memref<1x16xf32, #tpu.memory_space<vmem>>, %arg6: memref<128x16xf32, #tpu.memory_space<vmem>>, %arg7: memref<128x16xf32, #tpu.memory_space<vmem>>) attributes {dimension_semantics = [#tpu.dimension_semantics<parallel>, #tpu.dimension_semantics<parallel>, #tpu.dimension_semantics<arbitrary>], iteration_bounds = array<i64: 1, 1, 1>, scalar_prefetch = 0 : i64, scratch_operands = 1 : i64, tpu.core_type = #tpu.core_type<tc>, window_params = [{transform_indices = @transform_0, window_bounds = array<i64: 128, 16>}, {transform_indices = @transform_1, window_bounds = array<i64: 16, 16>}, {transform_indices = @transform_2, window_bounds = array<i64: 1, 16>}, {transform_indices = @transform_3, window_bounds = array<i64: 128, 16>}]} {
    %c0_i32 = arith.constant 0 : i32
    %0 = arith.cmpi eq, %arg2, %c0_i32 : i32
    %1 = arith.extui %0 : i1 to i32
    %c0_i32_0 = arith.constant 0 : i32
    %2 = arith.cmpi ne, %1, %c0_i32_0 : i32
    scf.if %2 {
      %cst_10 = arith.constant 0.000000e+00 : f32
      %12 = vector.broadcast %cst_10 : f32 to vector<128x16xf32>
      %c0_11 = arith.constant 0 : index
      %c0_12 = arith.constant 0 : index
      %13 = vector.load %arg7[%c0_11, %c0_12] : memref<128x16xf32, #tpu.memory_space<vmem>>, vector<128x16xf32>
      tpu.vector_store %arg7[%c0_11, %c0_12], %12 {strides = array<i32>} : memref<128x16xf32, #tpu.memory_space<vmem>>, vector<128x16xf32>,
    } else {
    }
    %c0 = arith.constant 0 : index
    %c0_1 = arith.constant 0 : index
    %3 = vector.load %arg7[%c0, %c0_1] : memref<128x16xf32, #tpu.memory_space<vmem>>, vector<128x16xf32>
    %c0_2 = arith.constant 0 : index
    %c0_3 = arith.constant 0 : index
    %4 = vector.load %arg3[%c0_2, %c0_3] : memref<128x16xbf16, #tpu.memory_space<vmem>>, vector<128x16xbf16>
    %c0_4 = arith.constant 0 : index
    %c0_5 = arith.constant 0 : index
    %5 = vector.load %arg4[%c0_4, %c0_5] : memref<16x16xbf16, #tpu.memory_space<vmem>>, vector<16x16xbf16>
    %cst = arith.constant dense<0.000000e+00> : vector<128x16xf32>
    %6 = tpu.matmul %4, %5, %cst {dimension_numbers = #tpu.dot_dimension_numbers<[1], [0], [0], [1], [0, 0, 1, 1], [], []>} : vector<128x16xbf16>, vector<16x16xbf16>, vector<128x16xf32> -> vector<128x16xf32>
    %7 = arith.addf %3, %6 : vector<128x16xf32>
    %c0_6 = arith.constant 0 : index
    %c0_7 = arith.constant 0 : index
    %8 = vector.load %arg7[%c0_6, %c0_7] : memref<128x16xf32, #tpu.memory_space<vmem>>, vector<128x16xf32>
    tpu.vector_store %arg7[%c0_6, %c0_7], %7 {strides = array<i32>} : memref<128x16xf32, #tpu.memory_space<vmem>>, vector<128x16xf32>,
    %c0_i32_8 = arith.constant 0 : i32
    %9 = arith.cmpi eq, %arg2, %c0_i32_8 : i32
    %10 = arith.extui %9 : i1 to i32
    %c0_i32_9 = arith.constant 0 : i32
    %11 = arith.cmpi ne, %10, %c0_i32_9 : i32
    scf.if %11 {
      %c0_10 = arith.constant 0 : index
      %c0_11 = arith.constant 0 : index
      %12 = vector.load %arg7[%c0_10, %c0_11] : memref<128x16xf32, #tpu.memory_space<vmem>>, vector<128x16xf32>
      %c0_12 = arith.constant 0 : index
      %c0_13 = arith.constant 0 : index
      %13 = vector.load %arg5[%c0_12, %c0_13] : memref<1x16xf32, #tpu.memory_space<vmem>>, vector<1x16xf32>
      %14 = vector.broadcast %13 : vector<1x16xf32> to vector<128x16xf32>
      %15 = arith.addf %12, %14 : vector<128x16xf32>
      %cst_14 = arith.constant 0.000000e+00 : f32
      %16 = vector.broadcast %cst_14 : f32 to vector<128x16xf32>
      %17 = arith.maximumf %15, %16 : vector<128x16xf32>
      %c0_15 = arith.constant 0 : index
      %c0_16 = arith.constant 0 : index
      %18 = vector.load %arg6[%c0_15, %c0_16] : memref<128x16xf32, #tpu.memory_space<vmem>>, vector<128x16xf32>
      tpu.vector_store %arg6[%c0_15, %c0_16], %17 {strides = array<i32>} : memref<128x16xf32, #tpu.memory_space<vmem>>, vector<128x16xf32>,
    } else {
    }
    return
  }
  func.func @transform_0(%arg0: i32, %arg1: i32, %arg2: i32) -> (i32, i32) {
    %c0_i32 = arith.constant 0 : i32
    return %arg0, %arg2 : i32, i32
  }
  func.func @transform_1(%arg0: i32, %arg1: i32, %arg2: i32) -> (i32, i32) {
    %c0_i32 = arith.constant 0 : i32
    return %arg2, %arg1 : i32, i32
  }
  func.func @transform_2(%arg0: i32, %arg1: i32, %arg2: i32) -> (i32, i32) {
    %c0_i32 = arith.constant 0 : i32
    %c0_i32_0 = arith.constant 0 : i32
    return %c0_i32, %arg1 : i32, i32
  }
  func.func @transform_3(%arg0: i32, %arg1: i32, %arg2: i32) -> (i32, i32) {
    %c0_i32 = arith.constant 0 : i32
    return %arg0, %arg1 : i32, i32
  }
}

module attributes {stable_mosaic.version = 11 : i64} {
  func.func @_matmul_bias_act_kernel(%arg0: i32, %arg1: i32, %arg2: i32, %arg3: memref<32x256xbf16, #tpu.memory_space<vmem>>, %arg4: memref<256x32xbf16, #tpu.memory_space<vmem>>, %arg5: memref<1x32xf32, #tpu.memory_space<vmem>>, %arg6: memref<32x32xf32, #tpu.memory_space<vmem>>, %arg7: memref<32x32xf32, #tpu.memory_space<vmem>>) attributes {dimension_semantics = [#tpu.dimension_semantics<parallel>, #tpu.dimension_semantics<parallel>, #tpu.dimension_semantics<arbitrary>], iteration_bounds = array<i64: 1, 1, 1>, scalar_prefetch = 0 : i64, scratch_operands = 1 : i64, tpu.core_type = #tpu.core_type<tc>, window_params = [{transform_indices = @transform_0, window_bounds = array<i64: 32, 256>}, {transform_indices = @transform_1, window_bounds = array<i64: 256, 32>}, {transform_indices = @transform_2, window_bounds = array<i64: 1, 32>}, {transform_indices = @transform_3, window_bounds = array<i64: 32, 32>}]} {
    %c0_i32 = arith.constant 0 : i32
    %0 = arith.cmpi eq, %arg2, %c0_i32 : i32
    %1 = arith.extui %0 : i1 to i32
    %c0_i32_0 = arith.constant 0 : i32
    %2 = arith.cmpi ne, %1, %c0_i32_0 : i32
    scf.if %2 {
      %cst_10 = arith.constant 0.000000e+00 : f32
      %12 = vector.broadcast %cst_10 : f32 to vector<32x32xf32>
      %c0_11 = arith.constant 0 : index
      %c0_12 = arith.constant 0 : index
      %13 = vector.load %arg7[%c0_11, %c0_12] : memref<32x32xf32, #tpu.memory_space<vmem>>, vector<32x32xf32>
      tpu.vector_store %arg7[%c0_11, %c0_12], %12 {strides = array<i32>} : memref<32x32xf32, #tpu.memory_space<vmem>>, vector<32x32xf32>,
    } else {
    }
    %c0 = arith.constant 0 : index
    %c0_1 = arith.constant 0 : index
    %3 = vector.load %arg7[%c0, %c0_1] : memref<32x32xf32, #tpu.memory_space<vmem>>, vector<32x32xf32>
    %c0_2 = arith.constant 0 : index
    %c0_3 = arith.constant 0 : index
    %4 = vector.load %arg3[%c0_2, %c0_3] : memref<32x256xbf16, #tpu.memory_space<vmem>>, vector<32x256xbf16>
    %c0_4 = arith.constant 0 : index
    %c0_5 = arith.constant 0 : index
    %5 = vector.load %arg4[%c0_4, %c0_5] : memref<256x32xbf16, #tpu.memory_space<vmem>>, vector<256x32xbf16>
    %cst = arith.constant dense<0.000000e+00> : vector<32x32xf32>
    %6 = tpu.matmul %4, %5, %cst {dimension_numbers = #tpu.dot_dimension_numbers<[1], [0], [0], [1], [0, 0, 1, 1], [], []>} : vector<32x256xbf16>, vector<256x32xbf16>, vector<32x32xf32> -> vector<32x32xf32>
    %7 = arith.addf %3, %6 : vector<32x32xf32>
    %c0_6 = arith.constant 0 : index
    %c0_7 = arith.constant 0 : index
    %8 = vector.load %arg7[%c0_6, %c0_7] : memref<32x32xf32, #tpu.memory_space<vmem>>, vector<32x32xf32>
    tpu.vector_store %arg7[%c0_6, %c0_7], %7 {strides = array<i32>} : memref<32x32xf32, #tpu.memory_space<vmem>>, vector<32x32xf32>,
    %c0_i32_8 = arith.constant 0 : i32
    %9 = arith.cmpi eq, %arg2, %c0_i32_8 : i32
    %10 = arith.extui %9 : i1 to i32
    %c0_i32_9 = arith.constant 0 : i32
    %11 = arith.cmpi ne, %10, %c0_i32_9 : i32
    scf.if %11 {
      %c0_10 = arith.constant 0 : index
      %c0_11 = arith.constant 0 : index
      %12 = vector.load %arg7[%c0_10, %c0_11] : memref<32x32xf32, #tpu.memory_space<vmem>>, vector<32x32xf32>
      %c0_12 = arith.constant 0 : index
      %c0_13 = arith.constant 0 : index
      %13 = vector.load %arg5[%c0_12, %c0_13] : memref<1x32xf32, #tpu.memory_space<vmem>>, vector<1x32xf32>
      %14 = vector.broadcast %13 : vector<1x32xf32> to vector<32x32xf32>
      %15 = arith.addf %12, %14 : vector<32x32xf32>
      %cst_14 = arith.constant 0.000000e+00 : f32
      %16 = vector.broadcast %cst_14 : f32 to vector<32x32xf32>
      %17 = arith.maximumf %15, %16 : vector<32x32xf32>
      %c0_15 = arith.constant 0 : index
      %c0_16 = arith.constant 0 : index
      %18 = vector.load %arg6[%c0_15, %c0_16] : memref<32x32xf32, #tpu.memory_space<vmem>>, vector<32x32xf32>
      tpu.vector_store %arg6[%c0_15, %c0_16], %17 {strides = array<i32>} : memref<32x32xf32, #tpu.memory_space<vmem>>, vector<32x32xf32>,
    } else {
    }
    return
  }
  func.func @transform_0(%arg0: i32, %arg1: i32, %arg2: i32) -> (i32, i32) {
    %c0_i32 = arith.constant 0 : i32
    return %arg0, %arg2 : i32, i32
  }
  func.func @transform_1(%arg0: i32, %arg1: i32, %arg2: i32) -> (i32, i32) {
    %c0_i32 = arith.constant 0 : i32
    return %arg2, %arg1 : i32, i32
  }
  func.func @transform_2(%arg0: i32, %arg1: i32, %arg2: i32) -> (i32, i32) {
    %c0_i32 = arith.constant 0 : i32
    %c0_i32_0 = arith.constant 0 : i32
    return %c0_i32, %arg1 : i32, i32
  }
  func.func @transform_3(%arg0: i32, %arg1: i32, %arg2: i32) -> (i32, i32) {
    %c0_i32 = arith.constant 0 : i32
    return %arg0, %arg1 : i32, i32
  }
}

module attributes {stable_mosaic.version = 11 : i64} {
  func.func @_heads_reparam_kernel(%arg0: i32, %arg1: memref<2x512xbf16, #tpu.memory_space<vmem>>, %arg2: memref<512x40xbf16, #tpu.memory_space<vmem>>, %arg3: memref<1x40xf32, #tpu.memory_space<vmem>>, %arg4: memref<2x20xf32, #tpu.memory_space<vmem>>, %arg5: memref<2x40xf32, #tpu.memory_space<vmem>>, %arg6: memref<2x20xf32, #tpu.memory_space<vmem>>, %arg7: memref<2x40xf32, #tpu.memory_space<vmem>>) attributes {dimension_semantics = [#tpu.dimension_semantics<arbitrary>], iteration_bounds = array<i64: 1>, scalar_prefetch = 0 : i64, scratch_operands = 1 : i64, tpu.core_type = #tpu.core_type<tc>, window_params = [{transform_indices = @transform_0, window_bounds = array<i64: 2, 512>}, {transform_indices = @transform_1, window_bounds = array<i64: 512, 40>}, {pipeline_mode = #tpu.pipeline_mode<synchronous>, transform_indices = @transform_2, window_bounds = array<i64: 1, 40>}, {pipeline_mode = #tpu.pipeline_mode<synchronous>, transform_indices = @transform_3, window_bounds = array<i64: 2, 20>}, {pipeline_mode = #tpu.pipeline_mode<synchronous>, transform_indices = @transform_4, window_bounds = array<i64: 2, 40>}, {pipeline_mode = #tpu.pipeline_mode<synchronous>, transform_indices = @transform_5, window_bounds = array<i64: 2, 20>}]} {
    %c0_i32 = arith.constant 0 : i32
    %0 = arith.cmpi eq, %arg0, %c0_i32 : i32
    %1 = arith.extui %0 : i1 to i32
    %c0_i32_0 = arith.constant 0 : i32
    %2 = arith.cmpi ne, %1, %c0_i32_0 : i32
    scf.if %2 {
      %cst_10 = arith.constant 0.000000e+00 : f32
      %12 = vector.broadcast %cst_10 : f32 to vector<2x40xf32>
      %c0_11 = arith.constant 0 : index
      %c0_12 = arith.constant 0 : index
      %13 = vector.load %arg7[%c0_11, %c0_12] : memref<2x40xf32, #tpu.memory_space<vmem>>, vector<2x40xf32>
      tpu.vector_store %arg7[%c0_11, %c0_12], %12 {strides = array<i32>} : memref<2x40xf32, #tpu.memory_space<vmem>>, vector<2x40xf32>,
    } else {
    }
    %c0 = arith.constant 0 : index
    %c0_1 = arith.constant 0 : index
    %3 = vector.load %arg7[%c0, %c0_1] : memref<2x40xf32, #tpu.memory_space<vmem>>, vector<2x40xf32>
    %c0_2 = arith.constant 0 : index
    %c0_3 = arith.constant 0 : index
    %4 = vector.load %arg1[%c0_2, %c0_3] : memref<2x512xbf16, #tpu.memory_space<vmem>>, vector<2x512xbf16>
    %c0_4 = arith.constant 0 : index
    %c0_5 = arith.constant 0 : index
    %5 = vector.load %arg2[%c0_4, %c0_5] : memref<512x40xbf16, #tpu.memory_space<vmem>>, vector<512x40xbf16>
    %cst = arith.constant dense<0.000000e+00> : vector<2x40xf32>
    %6 = tpu.matmul %4, %5, %cst {dimension_numbers = #tpu.dot_dimension_numbers<[1], [0], [0], [1], [0, 0, 1, 1], [], []>} : vector<2x512xbf16>, vector<512x40xbf16>, vector<2x40xf32> -> vector<2x40xf32>
    %7 = arith.addf %3, %6 : vector<2x40xf32>
    %c0_6 = arith.constant 0 : index
    %c0_7 = arith.constant 0 : index
    %8 = vector.load %arg7[%c0_6, %c0_7] : memref<2x40xf32, #tpu.memory_space<vmem>>, vector<2x40xf32>
    tpu.vector_store %arg7[%c0_6, %c0_7], %7 {strides = array<i32>} : memref<2x40xf32, #tpu.memory_space<vmem>>, vector<2x40xf32>,
    %c0_i32_8 = arith.constant 0 : i32
    %9 = arith.cmpi eq, %arg0, %c0_i32_8 : i32
    %10 = arith.extui %9 : i1 to i32
    %c0_i32_9 = arith.constant 0 : i32
    %11 = arith.cmpi ne, %10, %c0_i32_9 : i32
    scf.if %11 {
      %c0_10 = arith.constant 0 : index
      %c0_11 = arith.constant 0 : index
      %12 = vector.load %arg7[%c0_10, %c0_11] : memref<2x40xf32, #tpu.memory_space<vmem>>, vector<2x40xf32>
      %c0_12 = arith.constant 0 : index
      %c0_13 = arith.constant 0 : index
      %13 = vector.load %arg3[%c0_12, %c0_13] : memref<1x40xf32, #tpu.memory_space<vmem>>, vector<1x40xf32>
      %14 = vector.broadcast %13 : vector<1x40xf32> to vector<2x40xf32>
      %15 = arith.addf %12, %14 : vector<2x40xf32>
      %16 = vector.extract_strided_slice %15 {offsets = [0, 0], sizes = [2, 20], strides = [1, 1]} : vector<2x40xf32> to vector<2x20xf32>
      %17 = vector.extract_strided_slice %15 {offsets = [0, 20], sizes = [2, 20], strides = [1, 1]} : vector<2x40xf32> to vector<2x20xf32>
      %c0_14 = arith.constant 0 : index
      %c0_15 = arith.constant 0 : index
      %18 = vector.load %arg5[%c0_14, %c0_15] : memref<2x40xf32, #tpu.memory_space<vmem>>, vector<2x40xf32>
      tpu.vector_store %arg5[%c0_14, %c0_15], %15 {strides = array<i32>} : memref<2x40xf32, #tpu.memory_space<vmem>>, vector<2x40xf32>,
      %c0_16 = arith.constant 0 : index
      %c0_17 = arith.constant 0 : index
      %19 = vector.load %arg4[%c0_16, %c0_17] : memref<2x20xf32, #tpu.memory_space<vmem>>, vector<2x20xf32>
      %cst_18 = arith.constant 5.000000e-01 : f32
      %20 = vector.broadcast %cst_18 : f32 to vector<2x20xf32>
      %21 = arith.mulf %20, %17 : vector<2x20xf32>
      %22 = math.exp %21 : vector<2x20xf32>
      %23 = arith.mulf %19, %22 : vector<2x20xf32>
      %24 = arith.addf %16, %23 : vector<2x20xf32>
      %c0_19 = arith.constant 0 : index
      %c0_20 = arith.constant 0 : index
      %25 = vector.load %arg6[%c0_19, %c0_20] : memref<2x20xf32, #tpu.memory_space<vmem>>, vector<2x20xf32>
      tpu.vector_store %arg6[%c0_19, %c0_20], %24 {strides = array<i32>} : memref<2x20xf32, #tpu.memory_space<vmem>>, vector<2x20xf32>,
    } else {
    }
    return
  }
  func.func @transform_0(%arg0: i32) -> (i32, i32) {
    %c0_i32 = arith.constant 0 : i32
    %c0_i32_0 = arith.constant 0 : i32
    return %c0_i32, %arg0 : i32, i32
  }
  func.func @transform_1(%arg0: i32) -> (i32, i32) {
    %c0_i32 = arith.constant 0 : i32
    %c0_i32_0 = arith.constant 0 : i32
    return %arg0, %c0_i32 : i32, i32
  }
  func.func @transform_2(%arg0: i32) -> (i32, i32) {
    %c0_i32 = arith.constant 0 : i32
    %c0_i32_0 = arith.constant 0 : i32
    %c0_i32_1 = arith.constant 0 : i32
    return %c0_i32, %c0_i32_0 : i32, i32
  }
  func.func @transform_3(%arg0: i32) -> (i32, i32) {
    %c0_i32 = arith.constant 0 : i32
    %c0_i32_0 = arith.constant 0 : i32
    %c0_i32_1 = arith.constant 0 : i32
    return %c0_i32, %c0_i32_0 : i32, i32
  }
  func.func @transform_4(%arg0: i32) -> (i32, i32) {
    %c0_i32 = arith.constant 0 : i32
    %c0_i32_0 = arith.constant 0 : i32
    %c0_i32_1 = arith.constant 0 : i32
    return %c0_i32, %c0_i32_0 : i32, i32
  }
  func.func @transform_5(%arg0: i32) -> (i32, i32) {
    %c0_i32 = arith.constant 0 : i32
    %c0_i32_0 = arith.constant 0 : i32
    %c0_i32_1 = arith.constant 0 : i32
    return %c0_i32, %c0_i32_0 : i32, i32
  }
}

module attributes {stable_mosaic.version = 11 : i64} {
  func.func @_matmul_bias_act_kernel(%arg0: i32, %arg1: i32, %arg2: i32, %arg3: memref<8x20xbf16, #tpu.memory_space<vmem>>, %arg4: memref<20x512xbf16, #tpu.memory_space<vmem>>, %arg5: memref<1x512xf32, #tpu.memory_space<vmem>>, %arg6: memref<8x512xf32, #tpu.memory_space<vmem>>, %arg7: memref<8x512xf32, #tpu.memory_space<vmem>>) attributes {dimension_semantics = [#tpu.dimension_semantics<parallel>, #tpu.dimension_semantics<parallel>, #tpu.dimension_semantics<arbitrary>], iteration_bounds = array<i64: 1, 1, 1>, scalar_prefetch = 0 : i64, scratch_operands = 1 : i64, tpu.core_type = #tpu.core_type<tc>, window_params = [{transform_indices = @transform_0, window_bounds = array<i64: 8, 20>}, {transform_indices = @transform_1, window_bounds = array<i64: 20, 512>}, {transform_indices = @transform_2, window_bounds = array<i64: 1, 512>}, {transform_indices = @transform_3, window_bounds = array<i64: 8, 512>}]} {
    %c0_i32 = arith.constant 0 : i32
    %0 = arith.cmpi eq, %arg2, %c0_i32 : i32
    %1 = arith.extui %0 : i1 to i32
    %c0_i32_0 = arith.constant 0 : i32
    %2 = arith.cmpi ne, %1, %c0_i32_0 : i32
    scf.if %2 {
      %cst_10 = arith.constant 0.000000e+00 : f32
      %12 = vector.broadcast %cst_10 : f32 to vector<8x512xf32>
      %c0_11 = arith.constant 0 : index
      %c0_12 = arith.constant 0 : index
      %13 = vector.load %arg7[%c0_11, %c0_12] : memref<8x512xf32, #tpu.memory_space<vmem>>, vector<8x512xf32>
      tpu.vector_store %arg7[%c0_11, %c0_12], %12 {strides = array<i32>} : memref<8x512xf32, #tpu.memory_space<vmem>>, vector<8x512xf32>,
    } else {
    }
    %c0 = arith.constant 0 : index
    %c0_1 = arith.constant 0 : index
    %3 = vector.load %arg7[%c0, %c0_1] : memref<8x512xf32, #tpu.memory_space<vmem>>, vector<8x512xf32>
    %c0_2 = arith.constant 0 : index
    %c0_3 = arith.constant 0 : index
    %4 = vector.load %arg3[%c0_2, %c0_3] : memref<8x20xbf16, #tpu.memory_space<vmem>>, vector<8x20xbf16>
    %c0_4 = arith.constant 0 : index
    %c0_5 = arith.constant 0 : index
    %5 = vector.load %arg4[%c0_4, %c0_5] : memref<20x512xbf16, #tpu.memory_space<vmem>>, vector<20x512xbf16>
    %cst = arith.constant dense<0.000000e+00> : vector<8x512xf32>
    %6 = tpu.matmul %4, %5, %cst {dimension_numbers = #tpu.dot_dimension_numbers<[1], [0], [0], [1], [0, 0, 1, 1], [], []>} : vector<8x20xbf16>, vector<20x512xbf16>, vector<8x512xf32> -> vector<8x512xf32>
    %7 = arith.addf %3, %6 : vector<8x512xf32>
    %c0_6 = arith.constant 0 : index
    %c0_7 = arith.constant 0 : index
    %8 = vector.load %arg7[%c0_6, %c0_7] : memref<8x512xf32, #tpu.memory_space<vmem>>, vector<8x512xf32>
    tpu.vector_store %arg7[%c0_6, %c0_7], %7 {strides = array<i32>} : memref<8x512xf32, #tpu.memory_space<vmem>>, vector<8x512xf32>,
    %c0_i32_8 = arith.constant 0 : i32
    %9 = arith.cmpi eq, %arg2, %c0_i32_8 : i32
    %10 = arith.extui %9 : i1 to i32
    %c0_i32_9 = arith.constant 0 : i32
    %11 = arith.cmpi ne, %10, %c0_i32_9 : i32
    scf.if %11 {
      %c0_10 = arith.constant 0 : index
      %c0_11 = arith.constant 0 : index
      %12 = vector.load %arg7[%c0_10, %c0_11] : memref<8x512xf32, #tpu.memory_space<vmem>>, vector<8x512xf32>
      %c0_12 = arith.constant 0 : index
      %c0_13 = arith.constant 0 : index
      %13 = vector.load %arg5[%c0_12, %c0_13] : memref<1x512xf32, #tpu.memory_space<vmem>>, vector<1x512xf32>
      %14 = vector.broadcast %13 : vector<1x512xf32> to vector<8x512xf32>
      %15 = arith.addf %12, %14 : vector<8x512xf32>
      %c0_14 = arith.constant 0 : index
      %c0_15 = arith.constant 0 : index
      %16 = vector.load %arg6[%c0_14, %c0_15] : memref<8x512xf32, #tpu.memory_space<vmem>>, vector<8x512xf32>
      tpu.vector_store %arg6[%c0_14, %c0_15], %15 {strides = array<i32>} : memref<8x512xf32, #tpu.memory_space<vmem>>, vector<8x512xf32>,
    } else {
    }
    return
  }
  func.func @transform_0(%arg0: i32, %arg1: i32, %arg2: i32) -> (i32, i32) {
    %c0_i32 = arith.constant 0 : i32
    return %arg0, %arg2 : i32, i32
  }
  func.func @transform_1(%arg0: i32, %arg1: i32, %arg2: i32) -> (i32, i32) {
    %c0_i32 = arith.constant 0 : i32
    return %arg2, %arg1 : i32, i32
  }
  func.func @transform_2(%arg0: i32, %arg1: i32, %arg2: i32) -> (i32, i32) {
    %c0_i32 = arith.constant 0 : i32
    %c0_i32_0 = arith.constant 0 : i32
    return %c0_i32, %arg1 : i32, i32
  }
  func.func @transform_3(%arg0: i32, %arg1: i32, %arg2: i32) -> (i32, i32) {
    %c0_i32 = arith.constant 0 : i32
    return %arg0, %arg1 : i32, i32
  }
}

module attributes {stable_mosaic.version = 11 : i64} {
  func.func @_matmul_bias_act_kernel(%arg0: i32, %arg1: i32, %arg2: i32, %arg3: memref<32x288xbf16, #tpu.memory_space<vmem>>, %arg4: memref<288x64xbf16, #tpu.memory_space<vmem>>, %arg5: memref<1x64xf32, #tpu.memory_space<vmem>>, %arg6: memref<32x64xf32, #tpu.memory_space<vmem>>, %arg7: memref<32x64xf32, #tpu.memory_space<vmem>>) attributes {dimension_semantics = [#tpu.dimension_semantics<parallel>, #tpu.dimension_semantics<parallel>, #tpu.dimension_semantics<arbitrary>], iteration_bounds = array<i64: 1, 1, 1>, scalar_prefetch = 0 : i64, scratch_operands = 1 : i64, tpu.core_type = #tpu.core_type<tc>, window_params = [{transform_indices = @transform_0, window_bounds = array<i64: 32, 288>}, {transform_indices = @transform_1, window_bounds = array<i64: 288, 64>}, {transform_indices = @transform_2, window_bounds = array<i64: 1, 64>}, {transform_indices = @transform_3, window_bounds = array<i64: 32, 64>}]} {
    %c0_i32 = arith.constant 0 : i32
    %0 = arith.cmpi eq, %arg2, %c0_i32 : i32
    %1 = arith.extui %0 : i1 to i32
    %c0_i32_0 = arith.constant 0 : i32
    %2 = arith.cmpi ne, %1, %c0_i32_0 : i32
    scf.if %2 {
      %cst_10 = arith.constant 0.000000e+00 : f32
      %12 = vector.broadcast %cst_10 : f32 to vector<32x64xf32>
      %c0_11 = arith.constant 0 : index
      %c0_12 = arith.constant 0 : index
      %13 = vector.load %arg7[%c0_11, %c0_12] : memref<32x64xf32, #tpu.memory_space<vmem>>, vector<32x64xf32>
      tpu.vector_store %arg7[%c0_11, %c0_12], %12 {strides = array<i32>} : memref<32x64xf32, #tpu.memory_space<vmem>>, vector<32x64xf32>,
    } else {
    }
    %c0 = arith.constant 0 : index
    %c0_1 = arith.constant 0 : index
    %3 = vector.load %arg7[%c0, %c0_1] : memref<32x64xf32, #tpu.memory_space<vmem>>, vector<32x64xf32>
    %c0_2 = arith.constant 0 : index
    %c0_3 = arith.constant 0 : index
    %4 = vector.load %arg3[%c0_2, %c0_3] : memref<32x288xbf16, #tpu.memory_space<vmem>>, vector<32x288xbf16>
    %c0_4 = arith.constant 0 : index
    %c0_5 = arith.constant 0 : index
    %5 = vector.load %arg4[%c0_4, %c0_5] : memref<288x64xbf16, #tpu.memory_space<vmem>>, vector<288x64xbf16>
    %cst = arith.constant dense<0.000000e+00> : vector<32x64xf32>
    %6 = tpu.matmul %4, %5, %cst {dimension_numbers = #tpu.dot_dimension_numbers<[1], [0], [0], [1], [0, 0, 1, 1], [], []>} : vector<32x288xbf16>, vector<288x64xbf16>, vector<32x64xf32> -> vector<32x64xf32>
    %7 = arith.addf %3, %6 : vector<32x64xf32>
    %c0_6 = arith.constant 0 : index
    %c0_7 = arith.constant 0 : index
    %8 = vector.load %arg7[%c0_6, %c0_7] : memref<32x64xf32, #tpu.memory_space<vmem>>, vector<32x64xf32>
    tpu.vector_store %arg7[%c0_6, %c0_7], %7 {strides = array<i32>} : memref<32x64xf32, #tpu.memory_space<vmem>>, vector<32x64xf32>,
    %c0_i32_8 = arith.constant 0 : i32
    %9 = arith.cmpi eq, %arg2, %c0_i32_8 : i32
    %10 = arith.extui %9 : i1 to i32
    %c0_i32_9 = arith.constant 0 : i32
    %11 = arith.cmpi ne, %10, %c0_i32_9 : i32
    scf.if %11 {
      %c0_10 = arith.constant 0 : index
      %c0_11 = arith.constant 0 : index
      %12 = vector.load %arg7[%c0_10, %c0_11] : memref<32x64xf32, #tpu.memory_space<vmem>>, vector<32x64xf32>
      %c0_12 = arith.constant 0 : index
      %c0_13 = arith.constant 0 : index
      %13 = vector.load %arg5[%c0_12, %c0_13] : memref<1x64xf32, #tpu.memory_space<vmem>>, vector<1x64xf32>
      %14 = vector.broadcast %13 : vector<1x64xf32> to vector<32x64xf32>
      %15 = arith.addf %12, %14 : vector<32x64xf32>
      %cst_14 = arith.constant 0.000000e+00 : f32
      %16 = vector.broadcast %cst_14 : f32 to vector<32x64xf32>
      %17 = arith.maximumf %15, %16 : vector<32x64xf32>
      %c0_15 = arith.constant 0 : index
      %c0_16 = arith.constant 0 : index
      %18 = vector.load %arg6[%c0_15, %c0_16] : memref<32x64xf32, #tpu.memory_space<vmem>>, vector<32x64xf32>
      tpu.vector_store %arg6[%c0_15, %c0_16], %17 {strides = array<i32>} : memref<32x64xf32, #tpu.memory_space<vmem>>, vector<32x64xf32>,
    } else {
    }
    return
  }
  func.func @transform_0(%arg0: i32, %arg1: i32, %arg2: i32) -> (i32, i32) {
    %c0_i32 = arith.constant 0 : i32
    return %arg0, %arg2 : i32, i32
  }
  func.func @transform_1(%arg0: i32, %arg1: i32, %arg2: i32) -> (i32, i32) {
    %c0_i32 = arith.constant 0 : i32
    return %arg2, %arg1 : i32, i32
  }
  func.func @transform_2(%arg0: i32, %arg1: i32, %arg2: i32) -> (i32, i32) {
    %c0_i32 = arith.constant 0 : i32
    %c0_i32_0 = arith.constant 0 : i32
    return %c0_i32, %arg1 : i32, i32
  }
  func.func @transform_3(%arg0: i32, %arg1: i32, %arg2: i32) -> (i32, i32) {
    %c0_i32 = arith.constant 0 : i32
    return %arg0, %arg1 : i32, i32
  }
}

module attributes {stable_mosaic.version = 11 : i64} {
  func.func @_matmul_bias_act_kernel(%arg0: i32, %arg1: i32, %arg2: i32, %arg3: memref<128x144xbf16, #tpu.memory_space<vmem>>, %arg4: memref<144x4xbf16, #tpu.memory_space<vmem>>, %arg5: memref<1x4xf32, #tpu.memory_space<vmem>>, %arg6: memref<128x4xf32, #tpu.memory_space<vmem>>, %arg7: memref<128x4xf32, #tpu.memory_space<vmem>>) attributes {dimension_semantics = [#tpu.dimension_semantics<parallel>, #tpu.dimension_semantics<parallel>, #tpu.dimension_semantics<arbitrary>], iteration_bounds = array<i64: 1, 1, 1>, scalar_prefetch = 0 : i64, scratch_operands = 1 : i64, tpu.core_type = #tpu.core_type<tc>, window_params = [{transform_indices = @transform_0, window_bounds = array<i64: 128, 144>}, {transform_indices = @transform_1, window_bounds = array<i64: 144, 4>}, {transform_indices = @transform_2, window_bounds = array<i64: 1, 4>}, {transform_indices = @transform_3, window_bounds = array<i64: 128, 4>}]} {
    %c0_i32 = arith.constant 0 : i32
    %0 = arith.cmpi eq, %arg2, %c0_i32 : i32
    %1 = arith.extui %0 : i1 to i32
    %c0_i32_0 = arith.constant 0 : i32
    %2 = arith.cmpi ne, %1, %c0_i32_0 : i32
    scf.if %2 {
      %cst_10 = arith.constant 0.000000e+00 : f32
      %12 = vector.broadcast %cst_10 : f32 to vector<128x4xf32>
      %c0_11 = arith.constant 0 : index
      %c0_12 = arith.constant 0 : index
      %13 = vector.load %arg7[%c0_11, %c0_12] : memref<128x4xf32, #tpu.memory_space<vmem>>, vector<128x4xf32>
      tpu.vector_store %arg7[%c0_11, %c0_12], %12 {strides = array<i32>} : memref<128x4xf32, #tpu.memory_space<vmem>>, vector<128x4xf32>,
    } else {
    }
    %c0 = arith.constant 0 : index
    %c0_1 = arith.constant 0 : index
    %3 = vector.load %arg7[%c0, %c0_1] : memref<128x4xf32, #tpu.memory_space<vmem>>, vector<128x4xf32>
    %c0_2 = arith.constant 0 : index
    %c0_3 = arith.constant 0 : index
    %4 = vector.load %arg3[%c0_2, %c0_3] : memref<128x144xbf16, #tpu.memory_space<vmem>>, vector<128x144xbf16>
    %c0_4 = arith.constant 0 : index
    %c0_5 = arith.constant 0 : index
    %5 = vector.load %arg4[%c0_4, %c0_5] : memref<144x4xbf16, #tpu.memory_space<vmem>>, vector<144x4xbf16>
    %cst = arith.constant dense<0.000000e+00> : vector<128x4xf32>
    %6 = tpu.matmul %4, %5, %cst {dimension_numbers = #tpu.dot_dimension_numbers<[1], [0], [0], [1], [0, 0, 1, 1], [], []>} : vector<128x144xbf16>, vector<144x4xbf16>, vector<128x4xf32> -> vector<128x4xf32>
    %7 = arith.addf %3, %6 : vector<128x4xf32>
    %c0_6 = arith.constant 0 : index
    %c0_7 = arith.constant 0 : index
    %8 = vector.load %arg7[%c0_6, %c0_7] : memref<128x4xf32, #tpu.memory_space<vmem>>, vector<128x4xf32>
    tpu.vector_store %arg7[%c0_6, %c0_7], %7 {strides = array<i32>} : memref<128x4xf32, #tpu.memory_space<vmem>>, vector<128x4xf32>,
    %c0_i32_8 = arith.constant 0 : i32
    %9 = arith.cmpi eq, %arg2, %c0_i32_8 : i32
    %10 = arith.extui %9 : i1 to i32
    %c0_i32_9 = arith.constant 0 : i32
    %11 = arith.cmpi ne, %10, %c0_i32_9 : i32
    scf.if %11 {
      %c0_10 = arith.constant 0 : index
      %c0_11 = arith.constant 0 : index
      %12 = vector.load %arg7[%c0_10, %c0_11] : memref<128x4xf32, #tpu.memory_space<vmem>>, vector<128x4xf32>
      %c0_12 = arith.constant 0 : index
      %c0_13 = arith.constant 0 : index
      %13 = vector.load %arg5[%c0_12, %c0_13] : memref<1x4xf32, #tpu.memory_space<vmem>>, vector<1x4xf32>
      %14 = vector.broadcast %13 : vector<1x4xf32> to vector<128x4xf32>
      %15 = arith.addf %12, %14 : vector<128x4xf32>
      %16 = arith.negf %15 : vector<128x4xf32>
      %17 = math.exp %16 : vector<128x4xf32>
      %cst_14 = arith.constant 1.000000e+00 : f32
      %18 = vector.broadcast %cst_14 : f32 to vector<128x4xf32>
      %19 = arith.addf %18, %17 : vector<128x4xf32>
      %20 = arith.divf %18, %19 : vector<128x4xf32>
      %c0_15 = arith.constant 0 : index
      %c0_16 = arith.constant 0 : index
      %21 = vector.load %arg6[%c0_15, %c0_16] : memref<128x4xf32, #tpu.memory_space<vmem>>, vector<128x4xf32>
      tpu.vector_store %arg6[%c0_15, %c0_16], %20 {strides = array<i32>} : memref<128x4xf32, #tpu.memory_space<vmem>>, vector<128x4xf32>,
    } else {
    }
    return
  }
  func.func @transform_0(%arg0: i32, %arg1: i32, %arg2: i32) -> (i32, i32) {
    %c0_i32 = arith.constant 0 : i32
    return %arg0, %arg2 : i32, i32
  }
  func.func @transform_1(%arg0: i32, %arg1: i32, %arg2: i32) -> (i32, i32) {
    %c0_i32 = arith.constant 0 : i32
    return %arg2, %arg1 : i32, i32
  }
  func.func @transform_2(%arg0: i32, %arg1: i32, %arg2: i32) -> (i32, i32) {
    %c0_i32 = arith.constant 0 : i32
    %c0_i32_0 = arith.constant 0 : i32
    return %c0_i32, %arg1 : i32, i32
  }
  func.func @transform_3(%arg0: i32, %arg1: i32, %arg2: i32) -> (i32, i32) {
    %c0_i32 = arith.constant 0 : i32
    return %arg0, %arg1 : i32, i32
  }
}

</mosaic_0001>

<llo_original>
// kernel: conv_vae_forward.6
$region0: #{conv_vae_forward.6}
  #allocation0 [shape = 'u32[]', space=smem, size = 0x4, offset = 0x4, fixed_abs, tag = 'smem constant byte address 0x4 - core index']
  #allocation1 [shape = 'u32[144,128]{1,0:T(1,128)}', space=vmem, size = 0x12000, scoped, tag = 'internal scratch']
  #allocation2 [shape = 'f32[128,16]{1,0:T(8,128)}', space=vmem, size = 0x10000, scoped, tag = 'scratch operand']
  %s0 = inlined_call_operand.vmem [shape: bf16[128,16], index: 0, kind: input, shape index: {}]
  %s1 = inlined_call_operand.vmem [shape: bf16[16,16], index: 1, kind: input, shape index: {}]
  %s2 = inlined_call_operand.vmem [shape: f32[1,16], index: 2, kind: input, shape index: {}]
  %s3 = inlined_call_operand.vmem [shape: f32[128,16], index: 3, kind: output, shape index: {}]
  %s4 = sld [smem:[#allocation0]]
  $region30: #{conv_vae_forward.6} parent=0
    _
  %s6 = ssub.s32 1, %s4
  %s7 = scalar_select 0, %s6, %s4
  // Predicated region
  $region2: #{conv_vae_forward.6} parent=0 // pred_check
    _
  $region3: #{conv_vae_forward.6} parent=0 // pred_check_branch
    %9 = sbr.rel (0) target = $region5
  $region4: #{conv_vae_forward.6} parent=0 // pred_region
    _
  $region5: #{conv_vae_forward.6} parent=0 // pred_fallthru
    _
  // Predicated region
  $region6: #{conv_vae_forward.6} parent=0 // pred_check
    _
  $region7: #{conv_vae_forward.6} parent=0 // pred_check_branch
    %11 = sbr.rel (0) target = $region9
  $region8: #{conv_vae_forward.6} parent=0 // pred_region
    _
  $region9: #{conv_vae_forward.6} parent=0 // pred_fallthru
    _
  // Predicated region
  $region10: #{conv_vae_forward.6} parent=0 // pred_check
    _
  $region11: #{conv_vae_forward.6} parent=0 // pred_check_branch
    %13 = sbr.rel (0) target = $region13
  $region12: #{conv_vae_forward.6} parent=0 // pred_region
    _
  $region13: #{conv_vae_forward.6} parent=0 // pred_fallthru
    _
  %p15 = scmp.eq.s32.totalorder 0, 0
  // Predicated region
  $region14: #{conv_vae_forward.6} parent=0 // pred_check
    %p16 = pneg %p15
  $region15: #{conv_vae_forward.6} parent=0 // pred_check_branch
    %18 = sbr.rel (%p16) target = $region17
  $region16: #{conv_vae_forward.6} parent=0 // pred_region
    %vm19 = vcmask 130048
    %20 = vst.msk [vmem:[#allocation2] sm:$0xff] %vm19, 0.0
    %21 = vst.msk [vmem:[#allocation2 + $0x8] sm:$0xff] %vm19, 0.0
    %22 = vst.msk [vmem:[#allocation2 + $0x10] sm:$0xff] %vm19, 0.0
    %23 = vst.msk [vmem:[#allocation2 + $0x18] sm:$0xff] %vm19, 0.0
    %24 = vst.msk [vmem:[#allocation2 + $0x20] sm:$0xff] %vm19, 0.0
    %25 = vst.msk [vmem:[#allocation2 + $0x28] sm:$0xff] %vm19, 0.0
    %26 = vst.msk [vmem:[#allocation2 + $0x30] sm:$0xff] %vm19, 0.0
    %27 = vst.msk [vmem:[#allocation2 + $0x38] sm:$0xff] %vm19, 0.0
    %28 = vst.msk [vmem:[#allocation2 + $0x40] sm:$0xff] %vm19, 0.0
    %29 = vst.msk [vmem:[#allocation2 + $0x48] sm:$0xff] %vm19, 0.0
    %30 = vst.msk [vmem:[#allocation2 + $0x50] sm:$0xff] %vm19, 0.0
    %31 = vst.msk [vmem:[#allocation2 + $0x58] sm:$0xff] %vm19, 0.0
    %32 = vst.msk [vmem:[#allocation2 + $0x60] sm:$0xff] %vm19, 0.0
    %33 = vst.msk [vmem:[#allocation2 + $0x68] sm:$0xff] %vm19, 0.0
    %34 = vst.msk [vmem:[#allocation2 + $0x70] sm:$0xff] %vm19, 0.0
    %35 = vst.msk [vmem:[#allocation2 + $0x78] sm:$0xff] %vm19, 0.0
  $region17: #{conv_vae_forward.6} parent=0 // pred_fallthru
    _
  %v36 = vld [vmem:[#allocation2] sm:$0xff]
  %v37 = vld [vmem:[#allocation2 + $0x8] sm:$0xff]
  %v38 = vld [vmem:[#allocation2 + $0x10] sm:$0xff]
  %v39 = vld [vmem:[#allocation2 + $0x18] sm:$0xff]
  %v40 = vld [vmem:[#allocation2 + $0x20] sm:$0xff]
  %v41 = vld [vmem:[#allocation2 + $0x28] sm:$0xff]
  %v42 = vld [vmem:[#allocation2 + $0x30] sm:$0xff]
  %v43 = vld [vmem:[#allocation2 + $0x38] sm:$0xff]
  %v44 = vld [vmem:[#allocation2 + $0x40] sm:$0xff]
  %v45 = vld [vmem:[#allocation2 + $0x48] sm:$0xff]
  %v46 = vld [vmem:[#allocation2 + $0x50] sm:$0xff]
  %v47 = vld [vmem:[#allocation2 + $0x58] sm:$0xff]
  %v48 = vld [vmem:[#allocation2 + $0x60] sm:$0xff]
  %v49 = vld [vmem:[#allocation2 + $0x68] sm:$0xff]
  %v50 = vld [vmem:[#allocation2 + $0x70] sm:$0xff]
  %v51 = vld [vmem:[#allocation2 + $0x78] sm:$0xff]
  %v52 = vld [vmem:[%s0] sm:$0xf]
  %v53 = vld [vmem:[%s0 + $0x4] sm:$0xf]
  %v54 = vld [vmem:[%s0 + $0x8] sm:$0xf]
  %v55 = vld [vmem:[%s0 + $0xc] sm:$0xf]
  %v56 = vld [vmem:[%s0 + $0x10] sm:$0xf]
  %v57 = vld [vmem:[%s0 + $0x14] sm:$0xf]
  %v58 = vld [vmem:[%s0 + $0x18] sm:$0xf]
  %v59 = vld [vmem:[%s0 + $0x1c] sm:$0xf]
  %v60 = vld [vmem:[%s0 + $0x20] sm:$0xf]
  %v61 = vld [vmem:[%s0 + $0x24] sm:$0xf]
  %v62 = vld [vmem:[%s0 + $0x28] sm:$0xf]
  %v63 = vld [vmem:[%s0 + $0x2c] sm:$0xf]
  %v64 = vld [vmem:[%s0 + $0x30] sm:$0xf]
  %v65 = vld [vmem:[%s0 + $0x34] sm:$0xf]
  %v66 = vld [vmem:[%s0 + $0x38] sm:$0xf]
  %v67 = vld [vmem:[%s0 + $0x3c] sm:$0xf]
  %v68 = vld [vmem:[%s1] sm:$0xf]
  %v69 = vld [vmem:[%s1 + $0x4] sm:$0xf]
  %v86 = vunpack.c.l.b16 %v52
  %v87 = vunpack.c.l.b16 %v53
  %v88 = vunpack.c.l.b16 %v54
  %v89 = vunpack.c.l.b16 %v55
  %v90 = vunpack.c.l.b16 %v56
  %v91 = vunpack.c.l.b16 %v57
  %v92 = vunpack.c.l.b16 %v58
  %v93 = vunpack.c.l.b16 %v59
  %v94 = vunpack.c.l.b16 %v60
  %v95 = vunpack.c.l.b16 %v61
  %v96 = vunpack.c.l.b16 %v62
  %v97 = vunpack.c.l.b16 %v63
  %v98 = vunpack.c.l.b16 %v64
  %v99 = vunpack.c.l.b16 %v65
  %v100 = vunpack.c.l.b16 %v66
  %v101 = vunpack.c.l.b16 %v67
  %v102 = vpack.c.b16 %v87, %v86
  %v103 = vpack.c.b16 %v89, %v88
  %v104 = vpack.c.b16 %v91, %v90
  %v105 = vpack.c.b16 %v93, %v92
  %v106 = vpack.c.b16 %v95, %v94
  %v107 = vpack.c.b16 %v97, %v96
  %v108 = vpack.c.b16 %v99, %v98
  %v109 = vpack.c.b16 %v101, %v100
  %v112 = vunpack.c.l.b16 %v68
  %v113 = vunpack.c.l.b16 %v69
  %v114 = vpack.c.b16 %v113, %v112
  %vm116 = vcmask 130048
  %v118 = vsel %vm116, %v102, 0
  %v121 = vsel %vm116, %v103, 0
  %v124 = vsel %vm116, %v104, 0
  %v127 = vsel %vm116, %v105, 0
  %v130 = vsel %vm116, %v106, 0
  %v133 = vsel %vm116, %v107, 0
  %v136 = vsel %vm116, %v108, 0
  %v139 = vsel %vm116, %v109, 0
  %141 = vmatprep.subr.bf16.mxu0 0
  %142 = vmatpush1.bf16.msra.mxu0 %v114
  %143 = vmatprep.subr.bf16.mxu0 0
  %144 = vmatpush1.bf16.msra.mxu0 0
  %145 = vmatprep.subr.bf16.mxu0 0
  %146 = vmatpush1.bf16.msra.mxu0 0
  %147 = vmatprep.subr.bf16.mxu0 0
  %148 = vmatpush1.bf16.msra.mxu0 0
  %149 = vmatprep.subr.bf16.mxu0 0
  %150 = vmatpush1.bf16.msra.mxu0 0
  %151 = vmatprep.subr.bf16.mxu0 0
  %152 = vmatpush1.bf16.msra.mxu0 0
  %153 = vmatprep.subr.bf16.mxu0 0
  %154 = vmatpush1.bf16.msra.mxu0 0
  %155 = vmatprep.subr.bf16.mxu0 0
  %156 = vmatpush1.bf16.msra.mxu0 0
  %157 = vmatprep.subr.bf16.mxu0 0
  %158 = vmatpush1.bf16.msra.mxu0 0
  %159 = vmatprep.subr.bf16.mxu0 0
  %160 = vmatpush1.bf16.msra.mxu0 0
  %161 = vmatprep.subr.bf16.mxu0 0
  %162 = vmatpush1.bf16.msra.mxu0 0
  %163 = vmatprep.subr.bf16.mxu0 0
  %164 = vmatpush1.bf16.msra.mxu0 0
  %165 = vmatprep.subr.bf16.mxu0 0
  %166 = vmatpush1.bf16.msra.mxu0 0
  %167 = vmatprep.subr.bf16.mxu0 0
  %168 = vmatpush1.bf16.msra.mxu0 0
  %169 = vmatprep.subr.bf16.mxu0 0
  %170 = vmatpush1.bf16.msra.mxu0 0
  %171 = vmatprep.subr.bf16.mxu0 0
  %172 = vmatpush1.bf16.msra.mxu0 0
  %173 = vmatprep.mubr.bf16.mxu0 0
  %174 = vmatmul.mubr.bf16.gmra.mrb[0].mxu0 %v118
  %v175 = vpop.f32.mrb[0].mxu0
  %v176 = vadd.f32 0.0, %v175
  %v177 = vpop.f32.mrb[0].mxu0
  %v178 = vpop.f32.mrb[0].mxu0
  %v179 = vadd.f32 0.0, %v178
  %v180 = vpop.f32.mrb[0].mxu0
  %181 = vmatprep.mubr.bf16.mxu0 0
  %182 = vmatmul.mubr.bf16.gmra.mrb[0].mxu0 %v121
  %v183 = vpop.f32.mrb[0].mxu0
  %v184 = vadd.f32 0.0, %v183
  %v185 = vpop.f32.mrb[0].mxu0
  %v186 = vpop.f32.mrb[0].mxu0
  %v187 = vadd.f32 0.0, %v186
  %v188 = vpop.f32.mrb[0].mxu0
  %189 = vmatprep.mubr.bf16.mxu0 0
  %190 = vmatmul.mubr.bf16.gmra.mrb[0].mxu0 %v124
  %v191 = vpop.f32.mrb[0].mxu0
  %v192 = vadd.f32 0.0, %v191
  %v193 = vpop.f32.mrb[0].mxu0
  %v194 = vpop.f32.mrb[0].mxu0
  %v195 = vadd.f32 0.0, %v194
  %v196 = vpop.f32.mrb[0].mxu0
  %197 = vmatprep.mubr.bf16.mxu0 0
  %198 = vmatmul.mubr.bf16.gmra.mrb[0].mxu0 %v127
  %v199 = vpop.f32.mrb[0].mxu0
  %v200 = vadd.f32 0.0, %v199
  %v201 = vpop.f32.mrb[0].mxu0
  %v202 = vpop.f32.mrb[0].mxu0
  %v203 = vadd.f32 0.0, %v202
  %v204 = vpop.f32.mrb[0].mxu0
  %205 = vmatprep.mubr.bf16.mxu0 0
  %206 = vmatmul.mubr.bf16.gmra.mrb[0].mxu0 %v130
  %v207 = vpop.f32.mrb[0].mxu0
  %v208 = vadd.f32 0.0, %v207
  %v209 = vpop.f32.mrb[0].mxu0
  %v210 = vpop.f32.mrb[0].mxu0
  %v211 = vadd.f32 0.0, %v210
  %v212 = vpop.f32.mrb[0].mxu0
  %213 = vmatprep.mubr.bf16.mxu0 0
  %214 = vmatmul.mubr.bf16.gmra.mrb[0].mxu0 %v133
  %v215 = vpop.f32.mrb[0].mxu0
  %v216 = vadd.f32 0.0, %v215
  %v217 = vpop.f32.mrb[0].mxu0
  %v218 = vpop.f32.mrb[0].mxu0
  %v219 = vadd.f32 0.0, %v218
  %v220 = vpop.f32.mrb[0].mxu0
  %221 = vmatprep.mubr.bf16.mxu0 0
  %222 = vmatmul.mubr.bf16.gmra.mrb[0].mxu0 %v136
  %v223 = vpop.f32.mrb[0].mxu0
  %v224 = vadd.f32 0.0, %v223
  %v225 = vpop.f32.mrb[0].mxu0
  %v226 = vpop.f32.mrb[0].mxu0
  %v227 = vadd.f32 0.0, %v226
  %v228 = vpop.f32.mrb[0].mxu0
  %229 = vmatprep.mubr.bf16.mxu0 0
  %230 = vmatmul.mubr.bf16.gmra.mrb[0].mxu0 %v139
  %v231 = vpop.f32.mrb[0].mxu0
  %v232 = vadd.f32 0.0, %v231
  %v233 = vpop.f32.mrb[0].mxu0
  %v234 = vpop.f32.mrb[0].mxu0
  %v235 = vadd.f32 0.0, %v234
  %v236 = vpop.f32.mrb[0].mxu0
  %237 = vdwg.mxu0
  %v238 = vadd.f32 %v36, %v176
  %v239 = vadd.f32 %v37, %v179
  %v240 = vadd.f32 %v38, %v184
  %v241 = vadd.f32 %v39, %v187
  %v242 = vadd.f32 %v40, %v192
  %v243 = vadd.f32 %v41, %v195
  %v244 = vadd.f32 %v42, %v200
  %v245 = vadd.f32 %v43, %v203
  %v246 = vadd.f32 %v44, %v208
  %v247 = vadd.f32 %v45, %v211
  %v248 = vadd.f32 %v46, %v216
  %v249 = vadd.f32 %v47, %v219
  %v250 = vadd.f32 %v48, %v224
  %v251 = vadd.f32 %v49, %v227
  %v252 = vadd.f32 %v50, %v232
  %v253 = vadd.f32 %v51, %v235
  %254 = vst.msk [vmem:[#allocation2] sm:$0xff] %vm116, %v238
  %255 = vst.msk [vmem:[#allocation2 + $0x8] sm:$0xff] %vm116, %v239
  %256 = vst.msk [vmem:[#allocation2 + $0x10] sm:$0xff] %vm116, %v240
  %257 = vst.msk [vmem:[#allocation2 + $0x18] sm:$0xff] %vm116, %v241
  %258 = vst.msk [vmem:[#allocation2 + $0x20] sm:$0xff] %vm116, %v242
  %259 = vst.msk [vmem:[#allocation2 + $0x28] sm:$0xff] %vm116, %v243
  %260 = vst.msk [vmem:[#allocation2 + $0x30] sm:$0xff] %vm116, %v244
  %261 = vst.msk [vmem:[#allocation2 + $0x38] sm:$0xff] %vm116, %v245
  %262 = vst.msk [vmem:[#allocation2 + $0x40] sm:$0xff] %vm116, %v246
  %263 = vst.msk [vmem:[#allocation2 + $0x48] sm:$0xff] %vm116, %v247
  %264 = vst.msk [vmem:[#allocation2 + $0x50] sm:$0xff] %vm116, %v248
  %265 = vst.msk [vmem:[#allocation2 + $0x58] sm:$0xff] %vm116, %v249
  %266 = vst.msk [vmem:[#allocation2 + $0x60] sm:$0xff] %vm116, %v250
  %267 = vst.msk [vmem:[#allocation2 + $0x68] sm:$0xff] %vm116, %v251
  %268 = vst.msk [vmem:[#allocation2 + $0x70] sm:$0xff] %vm116, %v252
  %269 = vst.msk [vmem:[#allocation2 + $0x78] sm:$0xff] %vm116, %v253
  // Predicated region
  $region18: #{conv_vae_forward.6} parent=0 // pred_check
    %p270 = pneg %p15
  $region19: #{conv_vae_forward.6} parent=0 // pred_check_branch
    %272 = sbr.rel (%p270) target = $region21
  $region20: #{conv_vae_forward.6} parent=0 // pred_region
    %v273 = vld [vmem:[#allocation2] sm:$0xff]
    %v274 = vld [vmem:[#allocation2 + $0x8] sm:$0xff]
    %v275 = vld [vmem:[#allocation2 + $0x10] sm:$0xff]
    %v276 = vld [vmem:[#allocation2 + $0x18] sm:$0xff]
    %v277 = vld [vmem:[#allocation2 + $0x20] sm:$0xff]
    %v278 = vld [vmem:[#allocation2 + $0x28] sm:$0xff]
    %v279 = vld [vmem:[#allocation2 + $0x30] sm:$0xff]
    %v280 = vld [vmem:[#allocation2 + $0x38] sm:$0xff]
    %v281 = vld [vmem:[#allocation2 + $0x40] sm:$0xff]
    %v282 = vld [vmem:[#allocation2 + $0x48] sm:$0xff]
    %v283 = vld [vmem:[#allocation2 + $0x50] sm:$0xff]
    %v284 = vld [vmem:[#allocation2 + $0x58] sm:$0xff]
    %v285 = vld [vmem:[#allocation2 + $0x60] sm:$0xff]
    %v286 = vld [vmem:[#allocation2 + $0x68] sm:$0xff]
    %v287 = vld [vmem:[#allocation2 + $0x70] sm:$0xff]
    %v288 = vld [vmem:[#allocation2 + $0x78] sm:$0xff]
    %v289 = vld [vmem:[%s2] sm:$0x1]
    %v291 = vlaneseq
    %v292 = vshrl.u32 %v291, 7
    %v293 = vsub.s32 0, %v292
    %v294 = vrot.slane %v289, %v293
    %v296 = vadd.f32 %v273, %v294
    %v297 = vadd.f32 %v274, %v294
    %v298 = vadd.f32 %v275, %v294
    %v299 = vadd.f32 %v276, %v294
    %v300 = vadd.f32 %v277, %v294
    %v301 = vadd.f32 %v278, %v294
    %v302 = vadd.f32 %v279, %v294
    %v303 = vadd.f32 %v280, %v294
    %v304 = vadd.f32 %v281, %v294
    %v305 = vadd.f32 %v282, %v294
    %v306 = vadd.f32 %v283, %v294
    %v307 = vadd.f32 %v284, %v294
    %v308 = vadd.f32 %v285, %v294
    %v309 = vadd.f32 %v286, %v294
    %v310 = vadd.f32 %v287, %v294
    %v311 = vadd.f32 %v288, %v294
    %v312 = vmax.f32 %v296, 0.0
    %v313 = vmax.f32 %v297, 0.0
    %v314 = vmax.f32 %v298, 0.0
    %v315 = vmax.f32 %v299, 0.0
    %v316 = vmax.f32 %v300, 0.0
    %v317 = vmax.f32 %v301, 0.0
    %v318 = vmax.f32 %v302, 0.0
    %v319 = vmax.f32 %v303, 0.0
    %v320 = vmax.f32 %v304, 0.0
    %v321 = vmax.f32 %v305, 0.0
    %v322 = vmax.f32 %v306, 0.0
    %v323 = vmax.f32 %v307, 0.0
    %v324 = vmax.f32 %v308, 0.0
    %v325 = vmax.f32 %v309, 0.0
    %v326 = vmax.f32 %v310, 0.0
    %v327 = vmax.f32 %v311, 0.0
    %328 = vst.msk [vmem:[%s3] sm:$0xff] %vm116, %v312
    %329 = vst.msk [vmem:[%s3 + $0x8] sm:$0xff] %vm116, %v313
    %330 = vst.msk [vmem:[%s3 + $0x10] sm:$0xff] %vm116, %v314
    %331 = vst.msk [vmem:[%s3 + $0x18] sm:$0xff] %vm116, %v315
    %332 = vst.msk [vmem:[%s3 + $0x20] sm:$0xff] %vm116, %v316
    %333 = vst.msk [vmem:[%s3 + $0x28] sm:$0xff] %vm116, %v317
    %334 = vst.msk [vmem:[%s3 + $0x30] sm:$0xff] %vm116, %v318
    %335 = vst.msk [vmem:[%s3 + $0x38] sm:$0xff] %vm116, %v319
    %336 = vst.msk [vmem:[%s3 + $0x40] sm:$0xff] %vm116, %v320
    %337 = vst.msk [vmem:[%s3 + $0x48] sm:$0xff] %vm116, %v321
    %338 = vst.msk [vmem:[%s3 + $0x50] sm:$0xff] %vm116, %v322
    %339 = vst.msk [vmem:[%s3 + $0x58] sm:$0xff] %vm116, %v323
    %340 = vst.msk [vmem:[%s3 + $0x60] sm:$0xff] %vm116, %v324
    %341 = vst.msk [vmem:[%s3 + $0x68] sm:$0xff] %vm116, %v325
    %342 = vst.msk [vmem:[%s3 + $0x70] sm:$0xff] %vm116, %v326
    %343 = vst.msk [vmem:[%s3 + $0x78] sm:$0xff] %vm116, %v327
  $region21: #{conv_vae_forward.6} parent=0 // pred_fallthru
    _
  // Predicated region
  $region22: #{conv_vae_forward.6} parent=0 // pred_check
    _
  $region23: #{conv_vae_forward.6} parent=0 // pred_check_branch
    %345 = sbr.rel (0) target = $region25
  $region24: #{conv_vae_forward.6} parent=0 // pred_region
    _
  $region25: #{conv_vae_forward.6} parent=0 // pred_fallthru
    _
  // Predicated region
  $region26: #{conv_vae_forward.6} parent=0 // pred_check
    _
  $region27: #{conv_vae_forward.6} parent=0 // pred_check_branch
    %347 = sbr.rel (0) target = $region29
  $region28: #{conv_vae_forward.6} parent=0 // pred_region
    _
  $region29: #{conv_vae_forward.6} parent=0 // pred_fallthru
    _

// kernel: conv_vae_forward.7
$region0: #{conv_vae_forward.7}
  #allocation0 [shape = 'u32[]', space=smem, size = 0x4, offset = 0x4, fixed_abs, tag = 'smem constant byte address 0x4 - core index']
  #allocation1 [shape = 'u32[144,128]{1,0:T(1,128)}', space=vmem, size = 0x12000, scoped, tag = 'internal scratch']
  #allocation2 [shape = 'f32[32,32]{1,0:T(8,128)}', space=vmem, size = 0x4000, scoped, tag = 'scratch operand']
  %s0 = inlined_call_operand.vmem [shape: bf16[32,256], index: 0, kind: input, shape index: {}]
  %s1 = inlined_call_operand.vmem [shape: bf16[256,32], index: 1, kind: input, shape index: {}]
  %s2 = inlined_call_operand.vmem [shape: f32[1,32], index: 2, kind: input, shape index: {}]
  %s3 = inlined_call_operand.vmem [shape: f32[32,32], index: 3, kind: output, shape index: {}]
  %s4 = sld [smem:[#allocation0]]
  $region30: #{conv_vae_forward.7} parent=0
    _
  %s6 = ssub.s32 1, %s4
  %s7 = scalar_select 0, %s6, %s4
  // Predicated region
  $region2: #{conv_vae_forward.7} parent=0 // pred_check
    _
  $region3: #{conv_vae_forward.7} parent=0 // pred_check_branch
    %9 = sbr.rel (0) target = $region5
  $region4: #{conv_vae_forward.7} parent=0 // pred_region
    _
  $region5: #{conv_vae_forward.7} parent=0 // pred_fallthru
    _
  // Predicated region
  $region6: #{conv_vae_forward.7} parent=0 // pred_check
    _
  $region7: #{conv_vae_forward.7} parent=0 // pred_check_branch
    %11 = sbr.rel (0) target = $region9
  $region8: #{conv_vae_forward.7} parent=0 // pred_region
    _
  $region9: #{conv_vae_forward.7} parent=0 // pred_fallthru
    _
  // Predicated region
  $region10: #{conv_vae_forward.7} parent=0 // pred_check
    _
  $region11: #{conv_vae_forward.7} parent=0 // pred_check_branch
    %13 = sbr.rel (0) target = $region13
  $region12: #{conv_vae_forward.7} parent=0 // pred_region
    _
  $region13: #{conv_vae_forward.7} parent=0 // pred_fallthru
    _
  %p15 = scmp.eq.s32.totalorder 0, 0
  // Predicated region
  $region14: #{conv_vae_forward.7} parent=0 // pred_check
    %p16 = pneg %p15
  $region15: #{conv_vae_forward.7} parent=0 // pred_check_branch
    %18 = sbr.rel (%p16) target = $region17
  $region16: #{conv_vae_forward.7} parent=0 // pred_region
    %vm19 = vcmask 261120
    %20 = vst.msk [vmem:[#allocation2] sm:$0xff] %vm19, 0.0
    %21 = vst.msk [vmem:[#allocation2 + $0x8] sm:$0xff] %vm19, 0.0
    %22 = vst.msk [vmem:[#allocation2 + $0x10] sm:$0xff] %vm19, 0.0
    %23 = vst.msk [vmem:[#allocation2 + $0x18] sm:$0xff] %vm19, 0.0
  $region17: #{conv_vae_forward.7} parent=0 // pred_fallthru
    _
  %v24 = vld [vmem:[#allocation2] sm:$0xff]
  %v25 = vld [vmem:[#allocation2 + $0x8] sm:$0xff]
  %v26 = vld [vmem:[#allocation2 + $0x10] sm:$0xff]
  %v27 = vld [vmem:[#allocation2 + $0x18] sm:$0xff]
  %v28 = vld [vmem:[%s0] sm:$0xff]
  %v29 = vld [vmem:[%s0 + $0x8] sm:$0xff]
  %v30 = vld [vmem:[%s0 + $0x10] sm:$0xff]
  %v31 = vld [vmem:[%s0 + $0x18] sm:$0xff]
  %v32 = vld [vmem:[%s1] sm:$0xf]
  %v33 = vld [vmem:[%s1 + $0x4] sm:$0xf]
  %v34 = vld [vmem:[%s1 + $0x8] sm:$0xf]
  %v35 = vld [vmem:[%s1 + $0xc] sm:$0xf]
  %v36 = vld [vmem:[%s1 + $0x10] sm:$0xf]
  %v37 = vld [vmem:[%s1 + $0x14] sm:$0xf]
  %v38 = vld [vmem:[%s1 + $0x18] sm:$0xf]
  %v39 = vld [vmem:[%s1 + $0x1c] sm:$0xf]
  %v40 = vld [vmem:[%s1 + $0x20] sm:$0xf]
  %v41 = vld [vmem:[%s1 + $0x24] sm:$0xf]
  %v42 = vld [vmem:[%s1 + $0x28] sm:$0xf]
  %v43 = vld [vmem:[%s1 + $0x2c] sm:$0xf]
  %v44 = vld [vmem:[%s1 + $0x30] sm:$0xf]
  %v45 = vld [vmem:[%s1 + $0x34] sm:$0xf]
  %v46 = vld [vmem:[%s1 + $0x38] sm:$0xf]
  %v47 = vld [vmem:[%s1 + $0x3c] sm:$0xf]
  %v48 = vld [vmem:[%s1 + $0x40] sm:$0xf]
  %v49 = vld [vmem:[%s1 + $0x44] sm:$0xf]
  %v50 = vld [vmem:[%s1 + $0x48] sm:$0xf]
  %v51 = vld [vmem:[%s1 + $0x4c] sm:$0xf]
  %v52 = vld [vmem:[%s1 + $0x50] sm:$0xf]
  %v53 = vld [vmem:[%s1 + $0x54] sm:$0xf]
  %v54 = vld [vmem:[%s1 + $0x58] sm:$0xf]
  %v55 = vld [vmem:[%s1 + $0x5c] sm:$0xf]
  %v56 = vld [vmem:[%s1 + $0x60] sm:$0xf]
  %v57 = vld [vmem:[%s1 + $0x64] sm:$0xf]
  %v58 = vld [vmem:[%s1 + $0x68] sm:$0xf]
  %v59 = vld [vmem:[%s1 + $0x6c] sm:$0xf]
  %v60 = vld [vmem:[%s1 + $0x70] sm:$0xf]
  %v61 = vld [vmem:[%s1 + $0x74] sm:$0xf]
  %v62 = vld [vmem:[%s1 + $0x78] sm:$0xf]
  %v63 = vld [vmem:[%s1 + $0x7c] sm:$0xf]
  %v68 = vunpack.c.l.b16 %v28
  %v69 = vunpack.c.h.b16 %v28
  %v70 = vunpack.c.l.b16 %v29
  %v71 = vunpack.c.h.b16 %v29
  %v72 = vunpack.c.l.b16 %v30
  %v73 = vunpack.c.h.b16 %v30
  %v74 = vunpack.c.l.b16 %v31
  %v75 = vunpack.c.h.b16 %v31
  %v76 = vpack.c.b16 %v70, %v68
  %v77 = vpack.c.b16 %v71, %v69
  %v78 = vpack.c.b16 %v74, %v72
  %v79 = vpack.c.b16 %v75, %v73
  %v116 = vunpack.c.l.b16 %v32
  %v117 = vunpack.c.l.b16 %v33
  %v118 = vunpack.c.l.b16 %v34
  %v119 = vunpack.c.l.b16 %v35
  %v120 = vunpack.c.l.b16 %v36
  %v121 = vunpack.c.l.b16 %v37
  %v122 = vunpack.c.l.b16 %v38
  %v123 = vunpack.c.l.b16 %v39
  %v124 = vunpack.c.l.b16 %v40
  %v125 = vunpack.c.l.b16 %v41
  %v126 = vunpack.c.l.b16 %v42
  %v127 = vunpack.c.l.b16 %v43
  %v128 = vunpack.c.l.b16 %v44
  %v129 = vunpack.c.l.b16 %v45
  %v130 = vunpack.c.l.b16 %v46
  %v131 = vunpack.c.l.b16 %v47
  %v132 = vunpack.c.l.b16 %v48
  %v133 = vunpack.c.l.b16 %v49
  %v134 = vunpack.c.l.b16 %v50
  %v135 = vunpack.c.l.b16 %v51
  %v136 = vunpack.c.l.b16 %v52
  %v137 = vunpack.c.l.b16 %v53
  %v138 = vunpack.c.l.b16 %v54
  %v139 = vunpack.c.l.b16 %v55
  %v140 = vunpack.c.l.b16 %v56
  %v141 = vunpack.c.l.b16 %v57
  %v142 = vunpack.c.l.b16 %v58
  %v143 = vunpack.c.l.b16 %v59
  %v144 = vunpack.c.l.b16 %v60
  %v145 = vunpack.c.l.b16 %v61
  %v146 = vunpack.c.l.b16 %v62
  %v147 = vunpack.c.l.b16 %v63
  %v148 = vpack.c.b16 %v117, %v116
  %v149 = vpack.c.b16 %v119, %v118
  %v150 = vpack.c.b16 %v121, %v120
  %v151 = vpack.c.b16 %v123, %v122
  %v152 = vpack.c.b16 %v125, %v124
  %v153 = vpack.c.b16 %v127, %v126
  %v154 = vpack.c.b16 %v129, %v128
  %v155 = vpack.c.b16 %v131, %v130
  %v156 = vpack.c.b16 %v133, %v132
  %v157 = vpack.c.b16 %v135, %v134
  %v158 = vpack.c.b16 %v137, %v136
  %v159 = vpack.c.b16 %v139, %v138
  %v160 = vpack.c.b16 %v141, %v140
  %v161 = vpack.c.b16 %v143, %v142
  %v162 = vpack.c.b16 %v145, %v144
  %v163 = vpack.c.b16 %v147, %v146
  %180 = vmatprep.subr.bf16.mxu0 0
  %181 = vmatpush1.bf16.msra.mxu0 %v148
  %182 = vmatprep.subr.bf16.mxu0 0
  %183 = vmatpush1.bf16.msra.mxu0 %v149
  %184 = vmatprep.subr.bf16.mxu0 0
  %185 = vmatpush1.bf16.msra.mxu0 %v150
  %186 = vmatprep.subr.bf16.mxu0 0
  %187 = vmatpush1.bf16.msra.mxu0 %v151
  %188 = vmatprep.subr.bf16.mxu0 0
  %189 = vmatpush1.bf16.msra.mxu0 %v152
  %190 = vmatprep.subr.bf16.mxu0 0
  %191 = vmatpush1.bf16.msra.mxu0 %v153
  %192 = vmatprep.subr.bf16.mxu0 0
  %193 = vmatpush1.bf16.msra.mxu0 %v154
  %194 = vmatprep.subr.bf16.mxu0 0
  %195 = vmatpush1.bf16.msra.mxu0 %v155
  %196 = vmatprep.subr.bf16.mxu0 0
  %197 = vmatpush1.bf16.msra.mxu0 %v156
  %198 = vmatprep.subr.bf16.mxu0 0
  %199 = vmatpush1.bf16.msra.mxu0 %v157
  %200 = vmatprep.subr.bf16.mxu0 0
  %201 = vmatpush1.bf16.msra.mxu0 %v158
  %202 = vmatprep.subr.bf16.mxu0 0
  %203 = vmatpush1.bf16.msra.mxu0 %v159
  %204 = vmatprep.subr.bf16.mxu0 0
  %205 = vmatpush1.bf16.msra.mxu0 %v160
  %206 = vmatprep.subr.bf16.mxu0 0
  %207 = vmatpush1.bf16.msra.mxu0 %v161
  %208 = vmatprep.subr.bf16.mxu0 0
  %209 = vmatpush1.bf16.msra.mxu0 %v162
  %210 = vmatprep.subr.bf16.mxu0 0
  %211 = vmatpush1.bf16.msra.mxu0 %v163
  %212 = vmatprep.mubr.bf16.mxu0 %v77
  %213 = vmatmul.mubr.bf16.gmra.mrb[0].mxu0 %v76
  %v214 = vpop.f32.mrb[0].mxu0
  %v215 = vadd.f32 0.0, %v214
  %v216 = vpop.f32.mrb[0].mxu0
  %v217 = vpop.f32.mrb[0].mxu0
  %v218 = vadd.f32 0.0, %v217
  %v219 = vpop.f32.mrb[0].mxu0
  %220 = vmatprep.mubr.bf16.mxu0 %v79
  %221 = vmatmul.mubr.bf16.gmra.mrb[0].mxu0 %v78
  %v222 = vpop.f32.mrb[0].mxu0
  %v223 = vadd.f32 0.0, %v222
  %v224 = vpop.f32.mrb[0].mxu0
  %v225 = vpop.f32.mrb[0].mxu0
  %v226 = vadd.f32 0.0, %v225
  %v227 = vpop.f32.mrb[0].mxu0
  %228 = vdwg.mxu0
  %v229 = vadd.f32 %v24, %v215
  %v230 = vadd.f32 %v25, %v218
  %v231 = vadd.f32 %v26, %v223
  %v232 = vadd.f32 %v27, %v226
  %vm233 = vcmask 261120
  %234 = vst.msk [vmem:[#allocation2] sm:$0xff] %vm233, %v229
  %235 = vst.msk [vmem:[#allocation2 + $0x8] sm:$0xff] %vm233, %v230
  %236 = vst.msk [vmem:[#allocation2 + $0x10] sm:$0xff] %vm233, %v231
  %237 = vst.msk [vmem:[#allocation2 + $0x18] sm:$0xff] %vm233, %v232
  // Predicated region
  $region18: #{conv_vae_forward.7} parent=0 // pred_check
    %p238 = pneg %p15
  $region19: #{conv_vae_forward.7} parent=0 // pred_check_branch
    %240 = sbr.rel (%p238) target = $region21
  $region20: #{conv_vae_forward.7} parent=0 // pred_region
    %v241 = vld [vmem:[#allocation2] sm:$0xff]
    %v242 = vld [vmem:[#allocation2 + $0x8] sm:$0xff]
    %v243 = vld [vmem:[#allocation2 + $0x10] sm:$0xff]
    %v244 = vld [vmem:[#allocation2 + $0x18] sm:$0xff]
    %v245 = vld [vmem:[%s2] sm:$0x1]
    %v247 = vlaneseq
    %v248 = vshrl.u32 %v247, 7
    %v249 = vsub.s32 0, %v248
    %v250 = vrot.slane %v245, %v249
    %v252 = vadd.f32 %v241, %v250
    %v253 = vadd.f32 %v242, %v250
    %v254 = vadd.f32 %v243, %v250
    %v255 = vadd.f32 %v244, %v250
    %v256 = vmax.f32 %v252, 0.0
    %v257 = vmax.f32 %v253, 0.0
    %v258 = vmax.f32 %v254, 0.0
    %v259 = vmax.f32 %v255, 0.0
    %260 = vst.msk [vmem:[%s3] sm:$0xff] %vm233, %v256
    %261 = vst.msk [vmem:[%s3 + $0x8] sm:$0xff] %vm233, %v257
    %262 = vst.msk [vmem:[%s3 + $0x10] sm:$0xff] %vm233, %v258
    %263 = vst.msk [vmem:[%s3 + $0x18] sm:$0xff] %vm233, %v259
  $region21: #{conv_vae_forward.7} parent=0 // pred_fallthru
    _
  // Predicated region
  $region22: #{conv_vae_forward.7} parent=0 // pred_check
    _
  $region23: #{conv_vae_forward.7} parent=0 // pred_check_branch
    %265 = sbr.rel (0) target = $region25
  $region24: #{conv_vae_forward.7} parent=0 // pred_region
    _
  $region25: #{conv_vae_forward.7} parent=0 // pred_fallthru
    _
  // Predicated region
  $region26: #{conv_vae_forward.7} parent=0 // pred_check
    _
  $region27: #{conv_vae_forward.7} parent=0 // pred_check_branch
    %267 = sbr.rel (0) target = $region29
  $region28: #{conv_vae_forward.7} parent=0 // pred_region
    _
  $region29: #{conv_vae_forward.7} parent=0 // pred_fallthru
    _

// kernel: conv_vae_forward.8
$region0: #{conv_vae_forward.8}
  #allocation0 [shape = 'u32[]', space=smem, size = 0x4, offset = 0x4, fixed_abs, tag = 'smem constant byte address 0x4 - core index']
  #allocation1 [shape = 'u32[144,128]{1,0:T(1,128)}', space=vmem, size = 0x12000, scoped, tag = 'internal scratch']
  #allocation2 [shape = 'f32[2,40]{1,0:T(2,128)}', space=vmem, size = 0x400, scoped, tag = 'scratch operand']
  %s0 = inlined_call_operand.vmem [shape: bf16[2,512], index: 0, kind: input, shape index: {}]
  %s1 = inlined_call_operand.vmem [shape: bf16[512,40], index: 1, kind: input, shape index: {}]
  %s2 = inlined_call_operand.vmem [shape: f32[1,40], index: 2, kind: input, shape index: {}]
  %s3 = inlined_call_operand.vmem [shape: f32[2,20], index: 3, kind: input, shape index: {}]
  %s4 = inlined_call_operand.vmem [shape: f32[2,40], index: 4, kind: output, shape index: {0}]
  %s5 = inlined_call_operand.vmem [shape: f32[2,20], index: 5, kind: output, shape index: {1}]
  %6 = xla_tuple %s4, %s5
  %s7 = sld [smem:[#allocation0]]
  $region42: #{conv_vae_forward.8} parent=0
    _
  %s9 = ssub.s32 1, %s7
  %s10 = scalar_select 0, %s9, %s7
  // Predicated region
  $region2: #{conv_vae_forward.8} parent=0 // pred_check
    _
  $region3: #{conv_vae_forward.8} parent=0 // pred_check_branch
    %12 = sbr.rel (0) target = $region5
  $region4: #{conv_vae_forward.8} parent=0 // pred_region
    _
  $region5: #{conv_vae_forward.8} parent=0 // pred_fallthru
    _
  // Predicated region
  $region6: #{conv_vae_forward.8} parent=0 // pred_check
    _
  $region7: #{conv_vae_forward.8} parent=0 // pred_check_branch
    %14 = sbr.rel (0) target = $region9
  $region8: #{conv_vae_forward.8} parent=0 // pred_region
    _
  $region9: #{conv_vae_forward.8} parent=0 // pred_fallthru
    _
  // Predicated region
  $region10: #{conv_vae_forward.8} parent=0 // pred_check
    _
  $region11: #{conv_vae_forward.8} parent=0 // pred_check_branch
    %16 = sbr.rel (0) target = $region13
  $region12: #{conv_vae_forward.8} parent=0 // pred_region
    _
  $region13: #{conv_vae_forward.8} parent=0 // pred_fallthru
    _
  // Predicated region
  $region14: #{conv_vae_forward.8} parent=0 // pred_check
    _
  $region15: #{conv_vae_forward.8} parent=0 // pred_check_branch
    %18 = sbr.rel (0) target = $region17
  $region16: #{conv_vae_forward.8} parent=0 // pred_region
    _
  $region17: #{conv_vae_forward.8} parent=0 // pred_fallthru
    _
  %p20 = scmp.eq.s32.totalorder 0, 0
  // Predicated region
  $region18: #{conv_vae_forward.8} parent=0 // pred_check
    %p21 = pneg %p20
  $region19: #{conv_vae_forward.8} parent=0 // pred_check_branch
    %23 = sbr.rel (%p21) target = $region21
  $region20: #{conv_vae_forward.8} parent=0 // pred_region
    %vm24 = vcmask 320512
    %25 = vst.msk [vmem:[#allocation2] sm:$0x3] %vm24, 0.0
  $region21: #{conv_vae_forward.8} parent=0 // pred_fallthru
    _
  %v26 = vld [vmem:[#allocation2] sm:$0x3]
  %v27 = vld [vmem:[%s0] sm:$0xf]
  %v28 = vld [vmem:[%s1] sm:$0xf]
  %v29 = vld [vmem:[%s1 + $0x4] sm:$0xf]
  %v30 = vld [vmem:[%s1 + $0x8] sm:$0xf]
  %v31 = vld [vmem:[%s1 + $0xc] sm:$0xf]
  %v32 = vld [vmem:[%s1 + $0x10] sm:$0xf]
  %v33 = vld [vmem:[%s1 + $0x14] sm:$0xf]
  %v34 = vld [vmem:[%s1 + $0x18] sm:$0xf]
  %v35 = vld [vmem:[%s1 + $0x1c] sm:$0xf]
  %v36 = vld [vmem:[%s1 + $0x20] sm:$0xf]
  %v37 = vld [vmem:[%s1 + $0x24] sm:$0xf]
  %v38 = vld [vmem:[%s1 + $0x28] sm:$0xf]
  %v39 = vld [vmem:[%s1 + $0x2c] sm:$0xf]
  %v40 = vld [vmem:[%s1 + $0x30] sm:$0xf]
  %v41 = vld [vmem:[%s1 + $0x34] sm:$0xf]
  %v42 = vld [vmem:[%s1 + $0x38] sm:$0xf]
  %v43 = vld [vmem:[%s1 + $0x3c] sm:$0xf]
  %v44 = vld [vmem:[%s1 + $0x40] sm:$0xf]
  %v45 = vld [vmem:[%s1 + $0x44] sm:$0xf]
  %v46 = vld [vmem:[%s1 + $0x48] sm:$0xf]
  %v47 = vld [vmem:[%s1 + $0x4c] sm:$0xf]
  %v48 = vld [vmem:[%s1 + $0x50] sm:$0xf]
  %v49 = vld [vmem:[%s1 + $0x54] sm:$0xf]
  %v50 = vld [vmem:[%s1 + $0x58] sm:$0xf]
  %v51 = vld [vmem:[%s1 + $0x5c] sm:$0xf]
  %v52 = vld [vmem:[%s1 + $0x60] sm:$0xf]
  %v53 = vld [vmem:[%s1 + $0x64] sm:$0xf]
  %v54 = vld [vmem:[%s1 + $0x68] sm:$0xf]
  %v55 = vld [vmem:[%s1 + $0x6c] sm:$0xf]
  %v56 = vld [vmem:[%s1 + $0x70] sm:$0xf]
  %v57 = vld [vmem:[%s1 + $0x74] sm:$0xf]
  %v58 = vld [vmem:[%s1 + $0x78] sm:$0xf]
  %v59 = vld [vmem:[%s1 + $0x7c] sm:$0xf]
  %v60 = vld [vmem:[%s1 + $0x80] sm:$0xf]
  %v61 = vld [vmem:[%s1 + $0x84] sm:$0xf]
  %v62 = vld [vmem:[%s1 + $0x88] sm:$0xf]
  %v63 = vld [vmem:[%s1 + $0x8c] sm:$0xf]
  %v64 = vld [vmem:[%s1 + $0x90] sm:$0xf]
  %v65 = vld [vmem:[%s1 + $0x94] sm:$0xf]
  %v66 = vld [vmem:[%s1 + $0x98] sm:$0xf]
  %v67 = vld [vmem:[%s1 + $0x9c] sm:$0xf]
  %v68 = vld [vmem:[%s1 + $0xa0] sm:$0xf]
  %v69 = vld [vmem:[%s1 + $0xa4] sm:$0xf]
  %v70 = vld [vmem:[%s1 + $0xa8] sm:$0xf]
  %v71 = vld [vmem:[%s1 + $0xac] sm:$0xf]
  %v72 = vld [vmem:[%s1 + $0xb0] sm:$0xf]
  %v73 = vld [vmem:[%s1 + $0xb4] sm:$0xf]
  %v74 = vld [vmem:[%s1 + $0xb8] sm:$0xf]
  %v75 = vld [vmem:[%s1 + $0xbc] sm:$0xf]
  %v76 = vld [vmem:[%s1 + $0xc0] sm:$0xf]
  %v77 = vld [vmem:[%s1 + $0xc4] sm:$0xf]
  %v78 = vld [vmem:[%s1 + $0xc8] sm:$0xf]
  %v79 = vld [vmem:[%s1 + $0xcc] sm:$0xf]
  %v80 = vld [vmem:[%s1 + $0xd0] sm:$0xf]
  %v81 = vld [vmem:[%s1 + $0xd4] sm:$0xf]
  %v82 = vld [vmem:[%s1 + $0xd8] sm:$0xf]
  %v83 = vld [vmem:[%s1 + $0xdc] sm:$0xf]
  %v84 = vld [vmem:[%s1 + $0xe0] sm:$0xf]
  %v85 = vld [vmem:[%s1 + $0xe4] sm:$0xf]
  %v86 = vld [vmem:[%s1 + $0xe8] sm:$0xf]
  %v87 = vld [vmem:[%s1 + $0xec] sm:$0xf]
  %v88 = vld [vmem:[%s1 + $0xf0] sm:$0xf]
  %v89 = vld [vmem:[%s1 + $0xf4] sm:$0xf]
  %v90 = vld [vmem:[%s1 + $0xf8] sm:$0xf]
  %v91 = vld [vmem:[%s1 + $0xfc] sm:$0xf]
  %v94 = vunpack.c.l.s4 1966171168
  %v95 = vunpack.c.0.s8 %v94
  %v96 = vlaneseq
  %v97 = vshrl.u32 %v96, 7
  %v98 = vsub.s32 %v95, %v97
  %v99 = vrot.slane %v27, %v98
  %v100 = vcombine.high %v99, %v99
  %v102 = vunpack.c.l.s4 1966171168
  %v103 = vunpack.c.0.s8 %v102
  %v104 = vlaneseq
  %v105 = vshrl.u32 %v104, 7
  %v106 = vsub.s32 %v103, %v105
  %v107 = vrot.slane %v99, %v106
  %v109 = vunpack.c.l.s4 1966171168
  %v110 = vunpack.c.0.s8 %v109
  %v111 = vlaneseq
  %v112 = vshrl.u32 %v111, 7
  %v113 = vsub.s32 %v110, %v112
  %v114 = vrot.slane %v100, %v113
  %v115 = vcombine.high %v107, %v107
  %v116 = vcombine.high %v114, %v114
  %v185 = vunpack.c.l.b16 %v28
  %v186 = vunpack.c.l.b16 %v29
  %v187 = vunpack.c.l.b16 %v30
  %v188 = vunpack.c.l.b16 %v31
  %v189 = vunpack.c.l.b16 %v32
  %v190 = vunpack.c.l.b16 %v33
  %v191 = vunpack.c.l.b16 %v34
  %v192 = vunpack.c.l.b16 %v35
  %v193 = vunpack.c.l.b16 %v36
  %v194 = vunpack.c.l.b16 %v37
  %v195 = vunpack.c.l.b16 %v38
  %v196 = vunpack.c.l.b16 %v39
  %v197 = vunpack.c.l.b16 %v40
  %v198 = vunpack.c.l.b16 %v41
  %v199 = vunpack.c.l.b16 %v42
  %v200 = vunpack.c.l.b16 %v43
  %v201 = vunpack.c.l.b16 %v44
  %v202 = vunpack.c.l.b16 %v45
  %v203 = vunpack.c.l.b16 %v46
  %v204 = vunpack.c.l.b16 %v47
  %v205 = vunpack.c.l.b16 %v48
  %v206 = vunpack.c.l.b16 %v49
  %v207 = vunpack.c.l.b16 %v50
  %v208 = vunpack.c.l.b16 %v51
  %v209 = vunpack.c.l.b16 %v52
  %v210 = vunpack.c.l.b16 %v53
  %v211 = vunpack.c.l.b16 %v54
  %v212 = vunpack.c.l.b16 %v55
  %v213 = vunpack.c.l.b16 %v56
  %v214 = vunpack.c.l.b16 %v57
  %v215 = vunpack.c.l.b16 %v58
  %v216 = vunpack.c.l.b16 %v59
  %v217 = vunpack.c.l.b16 %v60
  %v218 = vunpack.c.l.b16 %v61
  %v219 = vunpack.c.l.b16 %v62
  %v220 = vunpack.c.l.b16 %v63
  %v221 = vunpack.c.l.b16 %v64
  %v222 = vunpack.c.l.b16 %v65
  %v223 = vunpack.c.l.b16 %v66
  %v224 = vunpack.c.l.b16 %v67
  %v225 = vunpack.c.l.b16 %v68
  %v226 = vunpack.c.l.b16 %v69
  %v227 = vunpack.c.l.b16 %v70
  %v228 = vunpack.c.l.b16 %v71
  %v229 = vunpack.c.l.b16 %v72
  %v230 = vunpack.c.l.b16 %v73
  %v231 = vunpack.c.l.b16 %v74
  %v232 = vunpack.c.l.b16 %v75
  %v233 = vunpack.c.l.b16 %v76
  %v234 = vunpack.c.l.b16 %v77
  %v235 = vunpack.c.l.b16 %v78
  %v236 = vunpack.c.l.b16 %v79
  %v237 = vunpack.c.l.b16 %v80
  %v238 = vunpack.c.l.b16 %v81
  %v239 = vunpack.c.l.b16 %v82
  %v240 = vunpack.c.l.b16 %v83
  %v241 = vunpack.c.l.b16 %v84
  %v242 = vunpack.c.l.b16 %v85
  %v243 = vunpack.c.l.b16 %v86
  %v244 = vunpack.c.l.b16 %v87
  %v245 = vunpack.c.l.b16 %v88
  %v246 = vunpack.c.l.b16 %v89
  %v247 = vunpack.c.l.b16 %v90
  %v248 = vunpack.c.l.b16 %v91
  %v249 = vpack.c.b16 %v186, %v185
  %v250 = vpack.c.b16 %v188, %v187
  %v251 = vpack.c.b16 %v190, %v189
  %v252 = vpack.c.b16 %v192, %v191
  %v253 = vpack.c.b16 %v194, %v193
  %v254 = vpack.c.b16 %v196, %v195
  %v255 = vpack.c.b16 %v198, %v197
  %v256 = vpack.c.b16 %v200, %v199
  %v257 = vpack.c.b16 %v202, %v201
  %v258 = vpack.c.b16 %v204, %v203
  %v259 = vpack.c.b16 %v206, %v205
  %v260 = vpack.c.b16 %v208, %v207
  %v261 = vpack.c.b16 %v210, %v209
  %v262 = vpack.c.b16 %v212, %v211
  %v263 = vpack.c.b16 %v214, %v213
  %v264 = vpack.c.b16 %v216, %v215
  %v265 = vpack.c.b16 %v218, %v217
  %v266 = vpack.c.b16 %v220, %v219
  %v267 = vpack.c.b16 %v222, %v221
  %v268 = vpack.c.b16 %v224, %v223
  %v269 = vpack.c.b16 %v226, %v225
  %v270 = vpack.c.b16 %v228, %v227
  %v271 = vpack.c.b16 %v230, %v229
  %v272 = vpack.c.b16 %v232, %v231
  %v273 = vpack.c.b16 %v234, %v233
  %v274 = vpack.c.b16 %v236, %v235
  %v275 = vpack.c.b16 %v238, %v237
  %v276 = vpack.c.b16 %v240, %v239
  %v277 = vpack.c.b16 %v242, %v241
  %v278 = vpack.c.b16 %v244, %v243
  %v279 = vpack.c.b16 %v246, %v245
  %v280 = vpack.c.b16 %v248, %v247
  %313 = vmatprep.subr.bf16.mxu0 0
  %314 = vmatpush1.bf16.msra.mxu0 %v249
  %315 = vmatprep.subr.bf16.mxu0 0
  %316 = vmatpush1.bf16.msra.mxu0 %v250
  %317 = vmatprep.subr.bf16.mxu0 0
  %318 = vmatpush1.bf16.msra.mxu0 %v251
  %319 = vmatprep.subr.bf16.mxu0 0
  %320 = vmatpush1.bf16.msra.mxu0 %v252
  %321 = vmatprep.subr.bf16.mxu0 0
  %322 = vmatpush1.bf16.msra.mxu0 %v253
  %323 = vmatprep.subr.bf16.mxu0 0
  %324 = vmatpush1.bf16.msra.mxu0 %v254
  %325 = vmatprep.subr.bf16.mxu0 0
  %326 = vmatpush1.bf16.msra.mxu0 %v255
  %327 = vmatprep.subr.bf16.mxu0 0
  %328 = vmatpush1.bf16.msra.mxu0 %v256
  %329 = vmatprep.subr.bf16.mxu0 0
  %330 = vmatpush1.bf16.msra.mxu0 %v257
  %331 = vmatprep.subr.bf16.mxu0 0
  %332 = vmatpush1.bf16.msra.mxu0 %v258
  %333 = vmatprep.subr.bf16.mxu0 0
  %334 = vmatpush1.bf16.msra.mxu0 %v259
  %335 = vmatprep.subr.bf16.mxu0 0
  %336 = vmatpush1.bf16.msra.mxu0 %v260
  %337 = vmatprep.subr.bf16.mxu0 0
  %338 = vmatpush1.bf16.msra.mxu0 %v261
  %339 = vmatprep.subr.bf16.mxu0 0
  %340 = vmatpush1.bf16.msra.mxu0 %v262
  %341 = vmatprep.subr.bf16.mxu0 0
  %342 = vmatpush1.bf16.msra.mxu0 %v263
  %343 = vmatprep.subr.bf16.mxu0 0
  %344 = vmatpush1.bf16.msra.mxu0 %v264
  %345 = vmatprep.mubr.bf16.mxu0 %v114
  %346 = vmatmul.mubr.bf16.gmra.mrb[0].mxu0 %v107
  %v347 = vpop.f32.mrb[0].mxu0
  %v348 = vadd.f32 0.0, %v347
  %v349 = vpop.f32.mrb[0].mxu0
  %v350 = vpop.f32.mrb[0].mxu0
  %v351 = vpop.f32.mrb[0].mxu0
  %352 = vdwg.mxu0
  %353 = vmatprep.subr.bf16.mxu0 0
  %354 = vmatpush1.bf16.msra.mxu0 %v265
  %355 = vmatprep.subr.bf16.mxu0 0
  %356 = vmatpush1.bf16.msra.mxu0 %v266
  %357 = vmatprep.subr.bf16.mxu0 0
  %358 = vmatpush1.bf16.msra.mxu0 %v267
  %359 = vmatprep.subr.bf16.mxu0 0
  %360 = vmatpush1.bf16.msra.mxu0 %v268
  %361 = vmatprep.subr.bf16.mxu0 0
  %362 = vmatpush1.bf16.msra.mxu0 %v269
  %363 = vmatprep.subr.bf16.mxu0 0
  %364 = vmatpush1.bf16.msra.mxu0 %v270
  %365 = vmatprep.subr.bf16.mxu0 0
  %366 = vmatpush1.bf16.msra.mxu0 %v271
  %367 = vmatprep.subr.bf16.mxu0 0
  %368 = vmatpush1.bf16.msra.mxu0 %v272
  %369 = vmatprep.subr.bf16.mxu0 0
  %370 = vmatpush1.bf16.msra.mxu0 %v273
  %371 = vmatprep.subr.bf16.mxu0 0
  %372 = vmatpush1.bf16.msra.mxu0 %v274
  %373 = vmatprep.subr.bf16.mxu0 0
  %374 = vmatpush1.bf16.msra.mxu0 %v275
  %375 = vmatprep.subr.bf16.mxu0 0
  %376 = vmatpush1.bf16.msra.mxu0 %v276
  %377 = vmatprep.subr.bf16.mxu0 0
  %378 = vmatpush1.bf16.msra.mxu0 %v277
  %379 = vmatprep.subr.bf16.mxu0 0
  %380 = vmatpush1.bf16.msra.mxu0 %v278
  %381 = vmatprep.subr.bf16.mxu0 0
  %382 = vmatpush1.bf16.msra.mxu0 %v279
  %383 = vmatprep.subr.bf16.mxu0 0
  %384 = vmatpush1.bf16.msra.mxu0 %v280
  %385 = vmatprep.mubr.bf16.mxu0 %v116
  %386 = vmatmul.mubr.bf16.gmra.mrb[0].mxu0 %v115
  %v387 = vpop.f32.mrb[0].mxu0
  %v388 = vadd.f32 %v348, %v387
  %v389 = vpop.f32.mrb[0].mxu0
  %v390 = vpop.f32.mrb[0].mxu0
  %v391 = vpop.f32.mrb[0].mxu0
  %392 = vdwg.mxu0
  %v393 = vadd.f32 %v26, %v388
  %vm394 = vcmask 320512
  %395 = vst.msk [vmem:[#allocation2] sm:$0x3] %vm394, %v393
  // Predicated region
  $region22: #{conv_vae_forward.8} parent=0 // pred_check
    %p396 = pneg %p20
  $region23: #{conv_vae_forward.8} parent=0 // pred_check_branch
    %398 = sbr.rel (%p396) target = $region25
  $region24: #{conv_vae_forward.8} parent=0 // pred_region
    %v399 = vld [vmem:[#allocation2] sm:$0x3]
    %v400 = vld [vmem:[%s2] sm:$0x1]
    %v402 = vlaneseq
    %v403 = vshrl.u32 %v402, 7
    %v404 = vsub.s32 0, %v403
    %v405 = vrot.slane %v400, %v404
    %v407 = vadd.f32 %v399, %v405
    %408 = vst.msk [vmem:[%s4] sm:$0x3] %vm394, %v407
    %v409 = vld [vmem:[%s3] sm:$0x3]
    %v410 = vmul.f32 %v407, 0.5
    %v411 = vmul.f32 %v410, 1.442695
    %v412 = vpow.pop %v411
    %414 = vrot.lane.b32.xlu0 %v412, 108
    %v415 = vpop.permute.xlu0 %414
    %v417 = vmul.f32 %v409, %v415
    %v418 = vadd.f32 %v407, %v417
    %vm419 = vcmask 156672
    %420 = vst.msk [vmem:[%s5] sm:$0x3] %vm419, %v418
  $region25: #{conv_vae_forward.8} parent=0 // pred_fallthru
    _
  // Predicated region
  $region26: #{conv_vae_forward.8} parent=0 // pred_check
    _
  $region27: #{conv_vae_forward.8} parent=0 // pred_check_branch
    %422 = sbr.rel (0) target = $region29
  $region28: #{conv_vae_forward.8} parent=0 // pred_region
    _
  $region29: #{conv_vae_forward.8} parent=0 // pred_fallthru
    _
  // Predicated region
  $region30: #{conv_vae_forward.8} parent=0 // pred_check
    _
  $region31: #{conv_vae_forward.8} parent=0 // pred_check_branch
    %424 = sbr.rel (0) target = $region33
  $region32: #{conv_vae_forward.8} parent=0 // pred_region
    _
  $region33: #{conv_vae_forward.8} parent=0 // pred_fallthru
    _
  // Predicated region
  $region34: #{conv_vae_forward.8} parent=0 // pred_check
    _
  $region35: #{conv_vae_forward.8} parent=0 // pred_check_branch
    %426 = sbr.rel (0) target = $region37
  $region36: #{conv_vae_forward.8} parent=0 // pred_region
    _
  $region37: #{conv_vae_forward.8} parent=0 // pred_fallthru
    _
  // Predicated region
  $region38: #{conv_vae_forward.8} parent=0 // pred_check
    _
  $region39: #{conv_vae_forward.8} parent=0 // pred_check_branch
    %428 = sbr.rel (0) target = $region41
  $region40: #{conv_vae_forward.8} parent=0 // pred_region
    _
  $region41: #{conv_vae_forward.8} parent=0 // pred_fallthru
    _

// kernel: conv_vae_forward.9
$region0: #{conv_vae_forward.9}
  #allocation0 [shape = 'u32[]', space=smem, size = 0x4, offset = 0x4, fixed_abs, tag = 'smem constant byte address 0x4 - core index']
  #allocation1 [shape = 'u32[144,128]{1,0:T(1,128)}', space=vmem, size = 0x12000, scoped, tag = 'internal scratch']
  #allocation2 [shape = 'f32[8,512]{1,0:T(8,128)}', space=vmem, size = 0x4000, scoped, tag = 'scratch operand']
  %s0 = inlined_call_operand.vmem [shape: bf16[8,20], index: 0, kind: input, shape index: {}]
  %s1 = inlined_call_operand.vmem [shape: bf16[20,512], index: 1, kind: input, shape index: {}]
  %s2 = inlined_call_operand.vmem [shape: f32[1,512], index: 2, kind: input, shape index: {}]
  %s3 = inlined_call_operand.vmem [shape: f32[8,512], index: 3, kind: output, shape index: {}]
  %s4 = sld [smem:[#allocation0]]
  $region30: #{conv_vae_forward.9} parent=0
    _
  %s6 = ssub.s32 1, %s4
  %s7 = scalar_select 0, %s6, %s4
  // Predicated region
  $region2: #{conv_vae_forward.9} parent=0 // pred_check
    _
  $region3: #{conv_vae_forward.9} parent=0 // pred_check_branch
    %9 = sbr.rel (0) target = $region5
  $region4: #{conv_vae_forward.9} parent=0 // pred_region
    _
  $region5: #{conv_vae_forward.9} parent=0 // pred_fallthru
    _
  // Predicated region
  $region6: #{conv_vae_forward.9} parent=0 // pred_check
    _
  $region7: #{conv_vae_forward.9} parent=0 // pred_check_branch
    %11 = sbr.rel (0) target = $region9
  $region8: #{conv_vae_forward.9} parent=0 // pred_region
    _
  $region9: #{conv_vae_forward.9} parent=0 // pred_fallthru
    _
  // Predicated region
  $region10: #{conv_vae_forward.9} parent=0 // pred_check
    _
  $region11: #{conv_vae_forward.9} parent=0 // pred_check_branch
    %13 = sbr.rel (0) target = $region13
  $region12: #{conv_vae_forward.9} parent=0 // pred_region
    _
  $region13: #{conv_vae_forward.9} parent=0 // pred_fallthru
    _
  %p15 = scmp.eq.s32.totalorder 0, 0
  // Predicated region
  $region14: #{conv_vae_forward.9} parent=0 // pred_check
    %p16 = pneg %p15
  $region15: #{conv_vae_forward.9} parent=0 // pred_check_branch
    %18 = sbr.rel (%p16) target = $region17
  $region16: #{conv_vae_forward.9} parent=0 // pred_region
    %19 = vst [vmem:[#allocation2] sm:$0xff] 0.0
    %20 = vst [vmem:[#allocation2 + $0x8] sm:$0xff] 0.0
    %21 = vst [vmem:[#allocation2 + $0x10] sm:$0xff] 0.0
    %22 = vst [vmem:[#allocation2 + $0x18] sm:$0xff] 0.0
  $region17: #{conv_vae_forward.9} parent=0 // pred_fallthru
    _
  %v23 = vld [vmem:[#allocation2] sm:$0xff]
  %v24 = vld [vmem:[#allocation2 + $0x8] sm:$0xff]
  %v25 = vld [vmem:[#allocation2 + $0x10] sm:$0xff]
  %v26 = vld [vmem:[#allocation2 + $0x18] sm:$0xff]
  %v27 = vld [vmem:[%s0] sm:$0xf]
  %v28 = vld [vmem:[%s1] sm:$0xff]
  %v29 = vld [vmem:[%s1 + $0x8] sm:$0xff]
  %v30 = vld [vmem:[%s1 + $0x10] sm:$0xff]
  %v31 = vld [vmem:[%s1 + $0x18] sm:$0xff]
  %v32 = vld [vmem:[%s1 + $0x20] sm:$0x33]
  %v33 = vld [vmem:[%s1 + $0x28] sm:$0x33]
  %v40 = vunpack.c.l.b16 %v28
  %v41 = vunpack.c.h.b16 %v28
  %v42 = vunpack.c.l.b16 %v29
  %v43 = vunpack.c.h.b16 %v29
  %v44 = vunpack.c.l.b16 %v30
  %v45 = vunpack.c.h.b16 %v30
  %v46 = vunpack.c.l.b16 %v31
  %v47 = vunpack.c.h.b16 %v31
  %v48 = vunpack.c.l.b16 %v32
  %v49 = vunpack.c.h.b16 %v32
  %v50 = vunpack.c.l.b16 %v33
  %v51 = vunpack.c.h.b16 %v33
  %v52 = vpack.c.b16 %v44, %v40
  %v53 = vpack.c.b16 %v45, %v41
  %v54 = vpack.c.b16 %v46, %v42
  %v55 = vpack.c.b16 %v47, %v43
  %v56 = vpack.c.b16 %v48, %v48
  %v57 = vpack.c.b16 %v49, %v49
  %v58 = vpack.c.b16 %v50, %v50
  %v59 = vpack.c.b16 %v51, %v51
  %vm64 = vcmask 162816
  %v66 = vsel %vm64, %v27, 0
  %vm68 = vcmask 1041408
  %v70 = vsel %vm68, %v56, 0
  %v73 = vsel %vm68, %v57, 0
  %v76 = vsel %vm68, %v58, 0
  %v79 = vsel %vm68, %v59, 0
  %81 = vmatprep.subr.bf16.mxu0 %v53
  %82 = vmatpush1.bf16.msra.mxu0 %v52
  %83 = vmatprep.subr.bf16.mxu0 %v73
  %84 = vmatpush1.bf16.msra.mxu0 %v70
  %85 = vmatprep.subr.bf16.mxu0 0
  %86 = vmatpush1.bf16.msra.mxu0 0
  %87 = vmatprep.subr.bf16.mxu0 0
  %88 = vmatpush1.bf16.msra.mxu0 0
  %89 = vmatprep.subr.bf16.mxu0 0
  %90 = vmatpush1.bf16.msra.mxu0 0
  %91 = vmatprep.subr.bf16.mxu0 0
  %92 = vmatpush1.bf16.msra.mxu0 0
  %93 = vmatprep.subr.bf16.mxu0 0
  %94 = vmatpush1.bf16.msra.mxu0 0
  %95 = vmatprep.subr.bf16.mxu0 0
  %96 = vmatpush1.bf16.msra.mxu0 0
  %97 = vmatprep.subr.bf16.mxu0 0
  %98 = vmatpush1.bf16.msra.mxu0 0
  %99 = vmatprep.subr.bf16.mxu0 0
  %100 = vmatpush1.bf16.msra.mxu0 0
  %101 = vmatprep.subr.bf16.mxu0 0
  %102 = vmatpush1.bf16.msra.mxu0 0
  %103 = vmatprep.subr.bf16.mxu0 0
  %104 = vmatpush1.bf16.msra.mxu0 0
  %105 = vmatprep.subr.bf16.mxu0 0
  %106 = vmatpush1.bf16.msra.mxu0 0
  %107 = vmatprep.subr.bf16.mxu0 0
  %108 = vmatpush1.bf16.msra.mxu0 0
  %109 = vmatprep.subr.bf16.mxu0 0
  %110 = vmatpush1.bf16.msra.mxu0 0
  %111 = vmatprep.subr.bf16.mxu0 0
  %112 = vmatpush1.bf16.msra.mxu0 0
  %113 = vmatprep.mubr.bf16.mxu0 0
  %114 = vmatmul.mubr.bf16.gmra.mrb[0].mxu0 %v66
  %v115 = vpop.f32.mrb[0].mxu0
  %v116 = vadd.f32 0.0, %v115
  %v117 = vpop.f32.mrb[0].mxu0
  %v118 = vadd.f32 0.0, %v117
  %v119 = vpop.f32.mrb[0].mxu0
  %v120 = vpop.f32.mrb[0].mxu0
  %121 = vdwg.mxu0
  %122 = vmatprep.subr.bf16.mxu0 %v55
  %123 = vmatpush1.bf16.msra.mxu0 %v54
  %124 = vmatprep.subr.bf16.mxu0 %v79
  %125 = vmatpush1.bf16.msra.mxu0 %v76
  %126 = vmatprep.subr.bf16.mxu0 0
  %127 = vmatpush1.bf16.msra.mxu0 0
  %128 = vmatprep.subr.bf16.mxu0 0
  %129 = vmatpush1.bf16.msra.mxu0 0
  %130 = vmatprep.subr.bf16.mxu0 0
  %131 = vmatpush1.bf16.msra.mxu0 0
  %132 = vmatprep.subr.bf16.mxu0 0
  %133 = vmatpush1.bf16.msra.mxu0 0
  %134 = vmatprep.subr.bf16.mxu0 0
  %135 = vmatpush1.bf16.msra.mxu0 0
  %136 = vmatprep.subr.bf16.mxu0 0
  %137 = vmatpush1.bf16.msra.mxu0 0
  %138 = vmatprep.subr.bf16.mxu0 0
  %139 = vmatpush1.bf16.msra.mxu0 0
  %140 = vmatprep.subr.bf16.mxu0 0
  %141 = vmatpush1.bf16.msra.mxu0 0
  %142 = vmatprep.subr.bf16.mxu0 0
  %143 = vmatpush1.bf16.msra.mxu0 0
  %144 = vmatprep.subr.bf16.mxu0 0
  %145 = vmatpush1.bf16.msra.mxu0 0
  %146 = vmatprep.subr.bf16.mxu0 0
  %147 = vmatpush1.bf16.msra.mxu0 0
  %148 = vmatprep.subr.bf16.mxu0 0
  %149 = vmatpush1.bf16.msra.mxu0 0
  %150 = vmatprep.subr.bf16.mxu0 0
  %151 = vmatpush1.bf16.msra.mxu0 0
  %152 = vmatprep.subr.bf16.mxu0 0
  %153 = vmatpush1.bf16.msra.mxu0 0
  %154 = vmatprep.mubr.bf16.mxu0 0
  %155 = vmatmul.mubr.bf16.gmra.mrb[0].mxu0 %v66
  %v156 = vpop.f32.mrb[0].mxu0
  %v157 = vadd.f32 0.0, %v156
  %v158 = vpop.f32.mrb[0].mxu0
  %v159 = vadd.f32 0.0, %v158
  %v160 = vpop.f32.mrb[0].mxu0
  %v161 = vpop.f32.mrb[0].mxu0
  %162 = vdwg.mxu0
  %v163 = vadd.f32 %v23, %v116
  %v164 = vadd.f32 %v24, %v118
  %v165 = vadd.f32 %v25, %v157
  %v166 = vadd.f32 %v26, %v159
  %167 = vst [vmem:[#allocation2] sm:$0xff] %v163
  %168 = vst [vmem:[#allocation2 + $0x8] sm:$0xff] %v164
  %169 = vst [vmem:[#allocation2 + $0x10] sm:$0xff] %v165
  %170 = vst [vmem:[#allocation2 + $0x18] sm:$0xff] %v166
  // Predicated region
  $region18: #{conv_vae_forward.9} parent=0 // pred_check
    %p171 = pneg %p15
  $region19: #{conv_vae_forward.9} parent=0 // pred_check_branch
    %173 = sbr.rel (%p171) target = $region21
  $region20: #{conv_vae_forward.9} parent=0 // pred_region
    %v174 = vld [vmem:[#allocation2] sm:$0xff]
    %v175 = vld [vmem:[#allocation2 + $0x8] sm:$0xff]
    %v176 = vld [vmem:[#allocation2 + $0x10] sm:$0xff]
    %v177 = vld [vmem:[#allocation2 + $0x18] sm:$0xff]
    %v178 = vld [vmem:[%s2] sm:$0xf]
    %v180 = vlaneseq
    %v181 = vshrl.u32 %v180, 7
    %v182 = vsub.s32 0, %v181
    %v183 = vrot.slane %v178, %v182
    %v184 = vlaneseq
    %v185 = vshrl.u32 %v184, 7
    %v186 = vsub.s32 1, %v185
    %v187 = vrot.slane %v178, %v186
    %v188 = vlaneseq
    %v189 = vshrl.u32 %v188, 7
    %v190 = vsub.s32 2, %v189
    %v191 = vrot.slane %v178, %v190
    %v192 = vlaneseq
    %v193 = vshrl.u32 %v192, 7
    %v194 = vsub.s32 3, %v193
    %v195 = vrot.slane %v178, %v194
    %v200 = vadd.f32 %v174, %v183
    %v201 = vadd.f32 %v175, %v187
    %v202 = vadd.f32 %v176, %v191
    %v203 = vadd.f32 %v177, %v195
    %204 = vst [vmem:[%s3] sm:$0xff] %v200
    %205 = vst [vmem:[%s3 + $0x8] sm:$0xff] %v201
    %206 = vst [vmem:[%s3 + $0x10] sm:$0xff] %v202
    %207 = vst [vmem:[%s3 + $0x18] sm:$0xff] %v203
  $region21: #{conv_vae_forward.9} parent=0 // pred_fallthru
    _
  // Predicated region
  $region22: #{conv_vae_forward.9} parent=0 // pred_check
    _
  $region23: #{conv_vae_forward.9} parent=0 // pred_check_branch
    %209 = sbr.rel (0) target = $region25
  $region24: #{conv_vae_forward.9} parent=0 // pred_region
    _
  $region25: #{conv_vae_forward.9} parent=0 // pred_fallthru
    _
  // Predicated region
  $region26: #{conv_vae_forward.9} parent=0 // pred_check
    _
  $region27: #{conv_vae_forward.9} parent=0 // pred_check_branch
    %211 = sbr.rel (0) target = $region29
  $region28: #{conv_vae_forward.9} parent=0 // pred_region
    _
  $region29: #{conv_vae_forward.9} parent=0 // pred_fallthru
    _

// kernel: tile.13
$region0: #{tile.13}
  #allocation0 [shape = 's32[1]{0}', space=sflag, size = 0x4, scoped, tag = 'scoped memory for tile.13']
  %s0 = inlined_call_operand.vmem [shape: f32[16], index: 0, kind: input, shape index: {}]
  %s1 = inlined_call_operand.vmem [shape: f32[4,16], index: 1, kind: output, shape index: {}]
  // Predicated region
  $region2: #{tile.13} parent=0 // pred_check
    _
  $region3: #{tile.13} parent=0 // pred_check_branch
    %3 = sbr.rel (0) target = $region5
  $region4: #{tile.13} parent=0 // pred_region
    _
  $region5: #{tile.13} parent=0 // pred_fallthru
    _
  %v4 = vld [vmem:[%s0] ss:$0 sm:$0xff]
  %5 = vst [vmem:[%s1] sm:$0xf] %v4

// kernel: tile.14
$region0: #{tile.14}
  %s0 = inlined_call_operand.vmem [shape: f32[4,16], index: 0, kind: input, shape index: {}]
  %s1 = inlined_call_operand.vmem [shape: f32[1,64], index: 1, kind: output, shape index: {}]
  $region1: #{tile.14} parent=0
    #allocation0 [shape = 'u8[4096]{0}', space=vmem, size = 0x1000, scoped, tag = 'scoped mem for output reshape']
    #allocation1 [shape = 'u8[4096]{0}', space=vmem, size = 0x1000, scoped, tag = 'scoped mem for input reshape']
    %s3 = sshllo.u32 0, 4
    %v4 = vld [vmem:[%s0] sm:%s3]
    %5 = vst [vmem:[#allocation1] sm:%s3] %v4
    %v6 = vld [vmem:[#allocation1] sm:$0x1]
    %vm7 = vcmask 130048
    %8 = vst.msk [vmem:[#allocation0] sm:$0x1] %vm7, %v6
    %s9 = scalar_lea.vmem [#allocation1], 3
    %v10 = vld [vmem:[%s9] sm:$0x1]
    %11 = vrot.lane.b32.xlu0 %v10, 48
    %v12 = vpop.permute.xlu0 %11
    %vm13 = vcmask 523648
    %14 = vst.msk [vmem:[#allocation0] sm:$0x1] %vm13, %v12
    %s15 = scalar_lea.vmem [#allocation1], 2
    %v16 = vld [vmem:[%s15] sm:$0x1]
    %17 = vrot.lane.b32.xlu0 %v16, 32
    %v18 = vpop.permute.xlu0 %17
    %vm19 = vcmask 392448
    %20 = vst.msk [vmem:[#allocation0] sm:$0x1] %vm19, %v18
    %s21 = scalar_lea.vmem [#allocation1], 1
    %v22 = vld [vmem:[%s21] sm:$0x1]
    %23 = vrot.lane.b32.xlu0 %v22, 16
    %v24 = vpop.permute.xlu0 %23
    %vm25 = vcmask 261248
    %26 = vst.msk [vmem:[#allocation0] sm:$0x1] %vm25, %v24
    %s28 = sshllo.u32 0, 1
    %v30 = vld [vmem:[#allocation0] sm:%s28]
    %s31 = sshllo.u32 0, 1
    %32 = vst [vmem:[%s1] sm:%s31] %v30

// kernel: conv_vae_forward.10
$region0: #{conv_vae_forward.10}
  #allocation0 [shape = 'u32[]', space=smem, size = 0x4, offset = 0x4, fixed_abs, tag = 'smem constant byte address 0x4 - core index']
  #allocation1 [shape = 'u32[144,128]{1,0:T(1,128)}', space=vmem, size = 0x12000, scoped, tag = 'internal scratch']
  #allocation2 [shape = 'f32[32,64]{1,0:T(8,128)}', space=vmem, size = 0x4000, scoped, tag = 'scratch operand']
  %s0 = inlined_call_operand.vmem [shape: bf16[32,288], index: 0, kind: input, shape index: {}]
  %s1 = inlined_call_operand.vmem [shape: bf16[288,64], index: 1, kind: input, shape index: {}]
  %s2 = inlined_call_operand.vmem [shape: f32[1,64], index: 2, kind: input, shape index: {}]
  %s3 = inlined_call_operand.vmem [shape: f32[32,64], index: 3, kind: output, shape index: {}]
  %s4 = sld [smem:[#allocation0]]
  $region30: #{conv_vae_forward.10} parent=0
    _
  %s6 = ssub.s32 1, %s4
  %s7 = scalar_select 0, %s6, %s4
  // Predicated region
  $region2: #{conv_vae_forward.10} parent=0 // pred_check
    _
  $region3: #{conv_vae_forward.10} parent=0 // pred_check_branch
    %9 = sbr.rel (0) target = $region5
  $region4: #{conv_vae_forward.10} parent=0 // pred_region
    _
  $region5: #{conv_vae_forward.10} parent=0 // pred_fallthru
    _
  // Predicated region
  $region6: #{conv_vae_forward.10} parent=0 // pred_check
    _
  $region7: #{conv_vae_forward.10} parent=0 // pred_check_branch
    %11 = sbr.rel (0) target = $region9
  $region8: #{conv_vae_forward.10} parent=0 // pred_region
    _
  $region9: #{conv_vae_forward.10} parent=0 // pred_fallthru
    _
  // Predicated region
  $region10: #{conv_vae_forward.10} parent=0 // pred_check
    _
  $region11: #{conv_vae_forward.10} parent=0 // pred_check_branch
    %13 = sbr.rel (0) target = $region13
  $region12: #{conv_vae_forward.10} parent=0 // pred_region
    _
  $region13: #{conv_vae_forward.10} parent=0 // pred_fallthru
    _
  %p15 = scmp.eq.s32.totalorder 0, 0
  // Predicated region
  $region14: #{conv_vae_forward.10} parent=0 // pred_check
    %p16 = pneg %p15
  $region15: #{conv_vae_forward.10} parent=0 // pred_check_branch
    %18 = sbr.rel (%p16) target = $region17
  $region16: #{conv_vae_forward.10} parent=0 // pred_region
    %vm19 = vcmask 523264
    %20 = vst.msk [vmem:[#allocation2] sm:$0xff] %vm19, 0.0
    %21 = vst.msk [vmem:[#allocation2 + $0x8] sm:$0xff] %vm19, 0.0
    %22 = vst.msk [vmem:[#allocation2 + $0x10] sm:$0xff] %vm19, 0.0
    %23 = vst.msk [vmem:[#allocation2 + $0x18] sm:$0xff] %vm19, 0.0
  $region17: #{conv_vae_forward.10} parent=0 // pred_fallthru
    _
  %v24 = vld [vmem:[#allocation2] sm:$0xff]
  %v25 = vld [vmem:[#allocation2 + $0x8] sm:$0xff]
  %v26 = vld [vmem:[#allocation2 + $0x10] sm:$0xff]
  %v27 = vld [vmem:[#allocation2 + $0x18] sm:$0xff]
  %v28 = vld [vmem:[%s0] sm:$0xff]
  %v29 = vld [vmem:[%s0 + $0x8] sm:$0xf]
  %v30 = vld [vmem:[%s0 + $0xc] sm:$0xff]
  %v31 = vld [vmem:[%s0 + $0x14] sm:$0xf]
  %v32 = vld [vmem:[%s0 + $0x18] sm:$0xff]
  %v33 = vld [vmem:[%s0 + $0x20] sm:$0xf]
  %v34 = vld [vmem:[%s0 + $0x24] sm:$0xff]
  %v35 = vld [vmem:[%s0 + $0x2c] sm:$0xf]
  %v36 = vld [vmem:[%s1] sm:$0xf]
  %v37 = vld [vmem:[%s1 + $0x4] sm:$0xf]
  %v38 = vld [vmem:[%s1 + $0x8] sm:$0xf]
  %v39 = vld [vmem:[%s1 + $0xc] sm:$0xf]
  %v40 = vld [vmem:[%s1 + $0x10] sm:$0xf]
  %v41 = vld [vmem:[%s1 + $0x14] sm:$0xf]
  %v42 = vld [vmem:[%s1 + $0x18] sm:$0xf]
  %v43 = vld [vmem:[%s1 + $0x1c] sm:$0xf]
  %v44 = vld [vmem:[%s1 + $0x20] sm:$0xf]
  %v45 = vld [vmem:[%s1 + $0x24] sm:$0xf]
  %v46 = vld [vmem:[%s1 + $0x28] sm:$0xf]
  %v47 = vld [vmem:[%s1 + $0x2c] sm:$0xf]
  %v48 = vld [vmem:[%s1 + $0x30] sm:$0xf]
  %v49 = vld [vmem:[%s1 + $0x34] sm:$0xf]
  %v50 = vld [vmem:[%s1 + $0x38] sm:$0xf]
  %v51 = vld [vmem:[%s1 + $0x3c] sm:$0xf]
  %v52 = vld [vmem:[%s1 + $0x40] sm:$0xf]
  %v53 = vld [vmem:[%s1 + $0x44] sm:$0xf]
  %v54 = vld [vmem:[%s1 + $0x48] sm:$0xf]
  %v55 = vld [vmem:[%s1 + $0x4c] sm:$0xf]
  %v56 = vld [vmem:[%s1 + $0x50] sm:$0xf]
  %v57 = vld [vmem:[%s1 + $0x54] sm:$0xf]
  %v58 = vld [vmem:[%s1 + $0x58] sm:$0xf]
  %v59 = vld [vmem:[%s1 + $0x5c] sm:$0xf]
  %v60 = vld [vmem:[%s1 + $0x60] sm:$0xf]
  %v61 = vld [vmem:[%s1 + $0x64] sm:$0xf]
  %v62 = vld [vmem:[%s1 + $0x68] sm:$0xf]
  %v63 = vld [vmem:[%s1 + $0x6c] sm:$0xf]
  %v64 = vld [vmem:[%s1 + $0x70] sm:$0xf]
  %v65 = vld [vmem:[%s1 + $0x74] sm:$0xf]
  %v66 = vld [vmem:[%s1 + $0x78] sm:$0xf]
  %v67 = vld [vmem:[%s1 + $0x7c] sm:$0xf]
  %v68 = vld [vmem:[%s1 + $0x80] sm:$0xf]
  %v69 = vld [vmem:[%s1 + $0x84] sm:$0xf]
  %v70 = vld [vmem:[%s1 + $0x88] sm:$0xf]
  %v71 = vld [vmem:[%s1 + $0x8c] sm:$0xf]
  %v80 = vunpack.c.l.b16 %v28
  %v81 = vunpack.c.h.b16 %v28
  %v82 = vunpack.c.l.b16 %v29
  %v83 = vunpack.c.l.b16 %v30
  %v84 = vunpack.c.h.b16 %v30
  %v85 = vunpack.c.l.b16 %v31
  %v86 = vunpack.c.l.b16 %v32
  %v87 = vunpack.c.h.b16 %v32
  %v88 = vunpack.c.l.b16 %v33
  %v89 = vunpack.c.l.b16 %v34
  %v90 = vunpack.c.h.b16 %v34
  %v91 = vunpack.c.l.b16 %v35
  %v92 = vpack.c.b16 %v83, %v80
  %v93 = vpack.c.b16 %v84, %v81
  %v94 = vpack.c.b16 %v85, %v82
  %v95 = vpack.c.b16 %v89, %v86
  %v96 = vpack.c.b16 %v90, %v87
  %v97 = vpack.c.b16 %v91, %v88
  %v138 = vunpack.c.l.b16 %v36
  %v139 = vunpack.c.l.b16 %v37
  %v140 = vunpack.c.l.b16 %v38
  %v141 = vunpack.c.l.b16 %v39
  %v142 = vunpack.c.l.b16 %v40
  %v143 = vunpack.c.l.b16 %v41
  %v144 = vunpack.c.l.b16 %v42
  %v145 = vunpack.c.l.b16 %v43
  %v146 = vunpack.c.l.b16 %v44
  %v147 = vunpack.c.l.b16 %v45
  %v148 = vunpack.c.l.b16 %v46
  %v149 = vunpack.c.l.b16 %v47
  %v150 = vunpack.c.l.b16 %v48
  %v151 = vunpack.c.l.b16 %v49
  %v152 = vunpack.c.l.b16 %v50
  %v153 = vunpack.c.l.b16 %v51
  %v154 = vunpack.c.l.b16 %v52
  %v155 = vunpack.c.l.b16 %v53
  %v156 = vunpack.c.l.b16 %v54
  %v157 = vunpack.c.l.b16 %v55
  %v158 = vunpack.c.l.b16 %v56
  %v159 = vunpack.c.l.b16 %v57
  %v160 = vunpack.c.l.b16 %v58
  %v161 = vunpack.c.l.b16 %v59
  %v162 = vunpack.c.l.b16 %v60
  %v163 = vunpack.c.l.b16 %v61
  %v164 = vunpack.c.l.b16 %v62
  %v165 = vunpack.c.l.b16 %v63
  %v166 = vunpack.c.l.b16 %v64
  %v167 = vunpack.c.l.b16 %v65
  %v168 = vunpack.c.l.b16 %v66
  %v169 = vunpack.c.l.b16 %v67
  %v170 = vunpack.c.l.b16 %v68
  %v171 = vunpack.c.l.b16 %v69
  %v172 = vunpack.c.l.b16 %v70
  %v173 = vunpack.c.l.b16 %v71
  %v174 = vpack.c.b16 %v139, %v138
  %v175 = vpack.c.b16 %v141, %v140
  %v176 = vpack.c.b16 %v143, %v142
  %v177 = vpack.c.b16 %v145, %v144
  %v178 = vpack.c.b16 %v147, %v146
  %v179 = vpack.c.b16 %v149, %v148
  %v180 = vpack.c.b16 %v151, %v150
  %v181 = vpack.c.b16 %v153, %v152
  %v182 = vpack.c.b16 %v155, %v154
  %v183 = vpack.c.b16 %v157, %v156
  %v184 = vpack.c.b16 %v159, %v158
  %v185 = vpack.c.b16 %v161, %v160
  %v186 = vpack.c.b16 %v163, %v162
  %v187 = vpack.c.b16 %v165, %v164
  %v188 = vpack.c.b16 %v167, %v166
  %v189 = vpack.c.b16 %v169, %v168
  %v190 = vpack.c.b16 %v171, %v170
  %v191 = vpack.c.b16 %v173, %v172
  %vm210 = vcmask 261120
  %v212 = vsel %vm210, %v94, 0
  %v215 = vsel %vm210, %v97, 0
  %217 = vmatprep.subr.bf16.mxu0 0
  %218 = vmatpush1.bf16.msra.mxu0 %v174
  %219 = vmatprep.subr.bf16.mxu0 0
  %220 = vmatpush1.bf16.msra.mxu0 %v175
  %221 = vmatprep.subr.bf16.mxu0 0
  %222 = vmatpush1.bf16.msra.mxu0 %v176
  %223 = vmatprep.subr.bf16.mxu0 0
  %224 = vmatpush1.bf16.msra.mxu0 %v177
  %225 = vmatprep.subr.bf16.mxu0 0
  %226 = vmatpush1.bf16.msra.mxu0 %v178
  %227 = vmatprep.subr.bf16.mxu0 0
  %228 = vmatpush1.bf16.msra.mxu0 %v179
  %229 = vmatprep.subr.bf16.mxu0 0
  %230 = vmatpush1.bf16.msra.mxu0 %v180
  %231 = vmatprep.subr.bf16.mxu0 0
  %232 = vmatpush1.bf16.msra.mxu0 %v181
  %233 = vmatprep.subr.bf16.mxu0 0
  %234 = vmatpush1.bf16.msra.mxu0 %v182
  %235 = vmatprep.subr.bf16.mxu0 0
  %236 = vmatpush1.bf16.msra.mxu0 %v183
  %237 = vmatprep.subr.bf16.mxu0 0
  %238 = vmatpush1.bf16.msra.mxu0 %v184
  %239 = vmatprep.subr.bf16.mxu0 0
  %240 = vmatpush1.bf16.msra.mxu0 %v185
  %241 = vmatprep.subr.bf16.mxu0 0
  %242 = vmatpush1.bf16.msra.mxu0 %v186
  %243 = vmatprep.subr.bf16.mxu0 0
  %244 = vmatpush1.bf16.msra.mxu0 %v187
  %245 = vmatprep.subr.bf16.mxu0 0
  %246 = vmatpush1.bf16.msra.mxu0 %v188
  %247 = vmatprep.subr.bf16.mxu0 0
  %248 = vmatpush1.bf16.msra.mxu0 %v189
  %249 = vmatprep.mubr.bf16.mxu0 %v93
  %250 = vmatmul.mubr.bf16.gmra.mrb[0].mxu0 %v92
  %v251 = vpop.f32.mrb[0].mxu0
  %v252 = vadd.f32 0.0, %v251
  %v253 = vpop.f32.mrb[0].mxu0
  %v254 = vpop.f32.mrb[0].mxu0
  %v255 = vadd.f32 0.0, %v254
  %v256 = vpop.f32.mrb[0].mxu0
  %257 = vmatprep.mubr.bf16.mxu0 %v96
  %258 = vmatmul.mubr.bf16.gmra.mrb[0].mxu0 %v95
  %v259 = vpop.f32.mrb[0].mxu0
  %v260 = vadd.f32 0.0, %v259
  %v261 = vpop.f32.mrb[0].mxu0
  %v262 = vpop.f32.mrb[0].mxu0
  %v263 = vadd.f32 0.0, %v262
  %v264 = vpop.f32.mrb[0].mxu0
  %265 = vdwg.mxu0
  %266 = vmatprep.subr.bf16.mxu0 0
  %267 = vmatpush1.bf16.msra.mxu0 %v190
  %268 = vmatprep.subr.bf16.mxu0 0
  %269 = vmatpush1.bf16.msra.mxu0 %v191
  %270 = vmatprep.subr.bf16.mxu0 0
  %271 = vmatpush1.bf16.msra.mxu0 0
  %272 = vmatprep.subr.bf16.mxu0 0
  %273 = vmatpush1.bf16.msra.mxu0 0
  %274 = vmatprep.subr.bf16.mxu0 0
  %275 = vmatpush1.bf16.msra.mxu0 0
  %276 = vmatprep.subr.bf16.mxu0 0
  %277 = vmatpush1.bf16.msra.mxu0 0
  %278 = vmatprep.subr.bf16.mxu0 0
  %279 = vmatpush1.bf16.msra.mxu0 0
  %280 = vmatprep.subr.bf16.mxu0 0
  %281 = vmatpush1.bf16.msra.mxu0 0
  %282 = vmatprep.subr.bf16.mxu0 0
  %283 = vmatpush1.bf16.msra.mxu0 0
  %284 = vmatprep.subr.bf16.mxu0 0
  %285 = vmatpush1.bf16.msra.mxu0 0
  %286 = vmatprep.subr.bf16.mxu0 0
  %287 = vmatpush1.bf16.msra.mxu0 0
  %288 = vmatprep.subr.bf16.mxu0 0
  %289 = vmatpush1.bf16.msra.mxu0 0
  %290 = vmatprep.subr.bf16.mxu0 0
  %291 = vmatpush1.bf16.msra.mxu0 0
  %292 = vmatprep.subr.bf16.mxu0 0
  %293 = vmatpush1.bf16.msra.mxu0 0
  %294 = vmatprep.subr.bf16.mxu0 0
  %295 = vmatpush1.bf16.msra.mxu0 0
  %296 = vmatprep.subr.bf16.mxu0 0
  %297 = vmatpush1.bf16.msra.mxu0 0
  %298 = vmatprep.mubr.bf16.mxu0 0
  %299 = vmatmul.mubr.bf16.gmra.mrb[0].mxu0 %v212
  %v300 = vpop.f32.mrb[0].mxu0
  %v301 = vadd.f32 %v252, %v300
  %v302 = vpop.f32.mrb[0].mxu0
  %v303 = vpop.f32.mrb[0].mxu0
  %v304 = vadd.f32 %v255, %v303
  %v305 = vpop.f32.mrb[0].mxu0
  %306 = vmatprep.mubr.bf16.mxu0 0
  %307 = vmatmul.mubr.bf16.gmra.mrb[0].mxu0 %v215
  %v308 = vpop.f32.mrb[0].mxu0
  %v309 = vadd.f32 %v260, %v308
  %v310 = vpop.f32.mrb[0].mxu0
  %v311 = vpop.f32.mrb[0].mxu0
  %v312 = vadd.f32 %v263, %v311
  %v313 = vpop.f32.mrb[0].mxu0
  %314 = vdwg.mxu0
  %v315 = vadd.f32 %v24, %v301
  %v316 = vadd.f32 %v25, %v304
  %v317 = vadd.f32 %v26, %v309
  %v318 = vadd.f32 %v27, %v312
  %vm319 = vcmask 523264
  %320 = vst.msk [vmem:[#allocation2] sm:$0xff] %vm319, %v315
  %321 = vst.msk [vmem:[#allocation2 + $0x8] sm:$0xff] %vm319, %v316
  %322 = vst.msk [vmem:[#allocation2 + $0x10] sm:$0xff] %vm319, %v317
  %323 = vst.msk [vmem:[#allocation2 + $0x18] sm:$0xff] %vm319, %v318
  // Predicated region
  $region18: #{conv_vae_forward.10} parent=0 // pred_check
    %p324 = pneg %p15
  $region19: #{conv_vae_forward.10} parent=0 // pred_check_branch
    %326 = sbr.rel (%p324) target = $region21
  $region20: #{conv_vae_forward.10} parent=0 // pred_region
    %v327 = vld [vmem:[#allocation2] sm:$0xff]
    %v328 = vld [vmem:[#allocation2 + $0x8] sm:$0xff]
    %v329 = vld [vmem:[#allocation2 + $0x10] sm:$0xff]
    %v330 = vld [vmem:[#allocation2 + $0x18] sm:$0xff]
    %v331 = vld [vmem:[%s2] sm:$0x1]
    %v333 = vlaneseq
    %v334 = vshrl.u32 %v333, 7
    %v335 = vsub.s32 0, %v334
    %v336 = vrot.slane %v331, %v335
    %v338 = vadd.f32 %v327, %v336
    %v339 = vadd.f32 %v328, %v336
    %v340 = vadd.f32 %v329, %v336
    %v341 = vadd.f32 %v330, %v336
    %v342 = vmax.f32 %v338, 0.0
    %v343 = vmax.f32 %v339, 0.0
    %v344 = vmax.f32 %v340, 0.0
    %v345 = vmax.f32 %v341, 0.0
    %346 = vst.msk [vmem:[%s3] sm:$0xff] %vm319, %v342
    %347 = vst.msk [vmem:[%s3 + $0x8] sm:$0xff] %vm319, %v343
    %348 = vst.msk [vmem:[%s3 + $0x10] sm:$0xff] %vm319, %v344
    %349 = vst.msk [vmem:[%s3 + $0x18] sm:$0xff] %vm319, %v345
  $region21: #{conv_vae_forward.10} parent=0 // pred_fallthru
    _
  // Predicated region
  $region22: #{conv_vae_forward.10} parent=0 // pred_check
    _
  $region23: #{conv_vae_forward.10} parent=0 // pred_check_branch
    %351 = sbr.rel (0) target = $region25
  $region24: #{conv_vae_forward.10} parent=0 // pred_region
    _
  $region25: #{conv_vae_forward.10} parent=0 // pred_fallthru
    _
  // Predicated region
  $region26: #{conv_vae_forward.10} parent=0 // pred_check
    _
  $region27: #{conv_vae_forward.10} parent=0 // pred_check_branch
    %353 = sbr.rel (0) target = $region29
  $region28: #{conv_vae_forward.10} parent=0 // pred_region
    _
  $region29: #{conv_vae_forward.10} parent=0 // pred_fallthru
    _

// kernel: conv_vae_forward.11
$region0: #{conv_vae_forward.11}
  #allocation0 [shape = 'u32[]', space=smem, size = 0x4, offset = 0x4, fixed_abs, tag = 'smem constant byte address 0x4 - core index']
  #allocation1 [shape = 'u32[144,128]{1,0:T(1,128)}', space=vmem, size = 0x12000, scoped, tag = 'internal scratch']
  #allocation2 [shape = 'f32[128,4]{1,0:T(8,128)}', space=vmem, size = 0x10000, scoped, tag = 'scratch operand']
  %s0 = inlined_call_operand.vmem [shape: bf16[128,144], index: 0, kind: input, shape index: {}]
  %s1 = inlined_call_operand.vmem [shape: bf16[144,4], index: 1, kind: input, shape index: {}]
  %s2 = inlined_call_operand.vmem [shape: f32[1,4], index: 2, kind: input, shape index: {}]
  %s3 = inlined_call_operand.vmem [shape: f32[128,4], index: 3, kind: output, shape index: {}]
  %s4 = sld [smem:[#allocation0]]
  $region30: #{conv_vae_forward.11} parent=0
    _
  %s6 = ssub.s32 1, %s4
  %s7 = scalar_select 0, %s6, %s4
  // Predicated region
  $region2: #{conv_vae_forward.11} parent=0 // pred_check
    _
  $region3: #{conv_vae_forward.11} parent=0 // pred_check_branch
    %9 = sbr.rel (0) target = $region5
  $region4: #{conv_vae_forward.11} parent=0 // pred_region
    _
  $region5: #{conv_vae_forward.11} parent=0 // pred_fallthru
    _
  // Predicated region
  $region6: #{conv_vae_forward.11} parent=0 // pred_check
    _
  $region7: #{conv_vae_forward.11} parent=0 // pred_check_branch
    %11 = sbr.rel (0) target = $region9
  $region8: #{conv_vae_forward.11} parent=0 // pred_region
    _
  $region9: #{conv_vae_forward.11} parent=0 // pred_fallthru
    _
  // Predicated region
  $region10: #{conv_vae_forward.11} parent=0 // pred_check
    _
  $region11: #{conv_vae_forward.11} parent=0 // pred_check_branch
    %13 = sbr.rel (0) target = $region13
  $region12: #{conv_vae_forward.11} parent=0 // pred_region
    _
  $region13: #{conv_vae_forward.11} parent=0 // pred_fallthru
    _
  %p15 = scmp.eq.s32.totalorder 0, 0
  // Predicated region
  $region14: #{conv_vae_forward.11} parent=0 // pred_check
    %p16 = pneg %p15
  $region15: #{conv_vae_forward.11} parent=0 // pred_check_branch
    %18 = sbr.rel (%p16) target = $region17
  $region16: #{conv_vae_forward.11} parent=0 // pred_region
    %vm19 = vcmask 31744
    %20 = vst.msk [vmem:[#allocation2] sm:$0xff] %vm19, 0.0
    %21 = vst.msk [vmem:[#allocation2 + $0x8] sm:$0xff] %vm19, 0.0
    %22 = vst.msk [vmem:[#allocation2 + $0x10] sm:$0xff] %vm19, 0.0
    %23 = vst.msk [vmem:[#allocation2 + $0x18] sm:$0xff] %vm19, 0.0
    %24 = vst.msk [vmem:[#allocation2 + $0x20] sm:$0xff] %vm19, 0.0
    %25 = vst.msk [vmem:[#allocation2 + $0x28] sm:$0xff] %vm19, 0.0
    %26 = vst.msk [vmem:[#allocation2 + $0x30] sm:$0xff] %vm19, 0.0
    %27 = vst.msk [vmem:[#allocation2 + $0x38] sm:$0xff] %vm19, 0.0
    %28 = vst.msk [vmem:[#allocation2 + $0x40] sm:$0xff] %vm19, 0.0
    %29 = vst.msk [vmem:[#allocation2 + $0x48] sm:$0xff] %vm19, 0.0
    %30 = vst.msk [vmem:[#allocation2 + $0x50] sm:$0xff] %vm19, 0.0
    %31 = vst.msk [vmem:[#allocation2 + $0x58] sm:$0xff] %vm19, 0.0
    %32 = vst.msk [vmem:[#allocation2 + $0x60] sm:$0xff] %vm19, 0.0
    %33 = vst.msk [vmem:[#allocation2 + $0x68] sm:$0xff] %vm19, 0.0
    %34 = vst.msk [vmem:[#allocation2 + $0x70] sm:$0xff] %vm19, 0.0
    %35 = vst.msk [vmem:[#allocation2 + $0x78] sm:$0xff] %vm19, 0.0
  $region17: #{conv_vae_forward.11} parent=0 // pred_fallthru
    _
  %v36 = vld [vmem:[#allocation2] sm:$0xff]
  %v37 = vld [vmem:[#allocation2 + $0x8] sm:$0xff]
  %v38 = vld [vmem:[#allocation2 + $0x10] sm:$0xff]
  %v39 = vld [vmem:[#allocation2 + $0x18] sm:$0xff]
  %v40 = vld [vmem:[#allocation2 + $0x20] sm:$0xff]
  %v41 = vld [vmem:[#allocation2 + $0x28] sm:$0xff]
  %v42 = vld [vmem:[#allocation2 + $0x30] sm:$0xff]
  %v43 = vld [vmem:[#allocation2 + $0x38] sm:$0xff]
  %v44 = vld [vmem:[#allocation2 + $0x40] sm:$0xff]
  %v45 = vld [vmem:[#allocation2 + $0x48] sm:$0xff]
  %v46 = vld [vmem:[#allocation2 + $0x50] sm:$0xff]
  %v47 = vld [vmem:[#allocation2 + $0x58] sm:$0xff]
  %v48 = vld [vmem:[#allocation2 + $0x60] sm:$0xff]
  %v49 = vld [vmem:[#allocation2 + $0x68] sm:$0xff]
  %v50 = vld [vmem:[#allocation2 + $0x70] sm:$0xff]
  %v51 = vld [vmem:[#allocation2 + $0x78] sm:$0xff]
  %v52 = vld [vmem:[%s0] sm:$0xff]
  %v53 = vld [vmem:[%s0 + $0x8] sm:$0xff]
  %v54 = vld [vmem:[%s0 + $0x10] sm:$0xff]
  %v55 = vld [vmem:[%s0 + $0x18] sm:$0xff]
  %v56 = vld [vmem:[%s0 + $0x20] sm:$0xff]
  %v57 = vld [vmem:[%s0 + $0x28] sm:$0xff]
  %v58 = vld [vmem:[%s0 + $0x30] sm:$0xff]
  %v59 = vld [vmem:[%s0 + $0x38] sm:$0xff]
  %v60 = vld [vmem:[%s0 + $0x40] sm:$0xff]
  %v61 = vld [vmem:[%s0 + $0x48] sm:$0xff]
  %v62 = vld [vmem:[%s0 + $0x50] sm:$0xff]
  %v63 = vld [vmem:[%s0 + $0x58] sm:$0xff]
  %v64 = vld [vmem:[%s0 + $0x60] sm:$0xff]
  %v65 = vld [vmem:[%s0 + $0x68] sm:$0xff]
  %v66 = vld [vmem:[%s0 + $0x70] sm:$0xff]
  %v67 = vld [vmem:[%s0 + $0x78] sm:$0xff]
  %v68 = vld [vmem:[%s1] sm:$0xf]
  %v69 = vld [vmem:[%s1 + $0x4] sm:$0xf]
  %v70 = vld [vmem:[%s1 + $0x8] sm:$0xf]
  %v71 = vld [vmem:[%s1 + $0xc] sm:$0xf]
  %v72 = vld [vmem:[%s1 + $0x10] sm:$0xf]
  %v73 = vld [vmem:[%s1 + $0x14] sm:$0xf]
  %v74 = vld [vmem:[%s1 + $0x18] sm:$0xf]
  %v75 = vld [vmem:[%s1 + $0x1c] sm:$0xf]
  %v76 = vld [vmem:[%s1 + $0x20] sm:$0xf]
  %v77 = vld [vmem:[%s1 + $0x24] sm:$0xf]
  %v78 = vld [vmem:[%s1 + $0x28] sm:$0xf]
  %v79 = vld [vmem:[%s1 + $0x2c] sm:$0xf]
  %v80 = vld [vmem:[%s1 + $0x30] sm:$0xf]
  %v81 = vld [vmem:[%s1 + $0x34] sm:$0xf]
  %v82 = vld [vmem:[%s1 + $0x38] sm:$0xf]
  %v83 = vld [vmem:[%s1 + $0x3c] sm:$0xf]
  %v84 = vld [vmem:[%s1 + $0x40] sm:$0xf]
  %v85 = vld [vmem:[%s1 + $0x44] sm:$0xf]
  %v102 = vunpack.c.l.b16 %v52
  %v103 = vunpack.c.h.b16 %v52
  %v104 = vunpack.c.l.b16 %v53
  %v105 = vunpack.c.h.b16 %v53
  %v106 = vunpack.c.l.b16 %v54
  %v107 = vunpack.c.h.b16 %v54
  %v108 = vunpack.c.l.b16 %v55
  %v109 = vunpack.c.h.b16 %v55
  %v110 = vunpack.c.l.b16 %v56
  %v111 = vunpack.c.h.b16 %v56
  %v112 = vunpack.c.l.b16 %v57
  %v113 = vunpack.c.h.b16 %v57
  %v114 = vunpack.c.l.b16 %v58
  %v115 = vunpack.c.h.b16 %v58
  %v116 = vunpack.c.l.b16 %v59
  %v117 = vunpack.c.h.b16 %v59
  %v118 = vunpack.c.l.b16 %v60
  %v119 = vunpack.c.h.b16 %v60
  %v120 = vunpack.c.l.b16 %v61
  %v121 = vunpack.c.h.b16 %v61
  %v122 = vunpack.c.l.b16 %v62
  %v123 = vunpack.c.h.b16 %v62
  %v124 = vunpack.c.l.b16 %v63
  %v125 = vunpack.c.h.b16 %v63
  %v126 = vunpack.c.l.b16 %v64
  %v127 = vunpack.c.h.b16 %v64
  %v128 = vunpack.c.l.b16 %v65
  %v129 = vunpack.c.h.b16 %v65
  %v130 = vunpack.c.l.b16 %v66
  %v131 = vunpack.c.h.b16 %v66
  %v132 = vunpack.c.l.b16 %v67
  %v133 = vunpack.c.h.b16 %v67
  %v134 = vpack.c.b16 %v104, %v102
  %v135 = vpack.c.b16 %v105, %v103
  %v136 = vpack.c.b16 %v108, %v106
  %v137 = vpack.c.b16 %v109, %v107
  %v138 = vpack.c.b16 %v112, %v110
  %v139 = vpack.c.b16 %v113, %v111
  %v140 = vpack.c.b16 %v116, %v114
  %v141 = vpack.c.b16 %v117, %v115
  %v142 = vpack.c.b16 %v120, %v118
  %v143 = vpack.c.b16 %v121, %v119
  %v144 = vpack.c.b16 %v124, %v122
  %v145 = vpack.c.b16 %v125, %v123
  %v146 = vpack.c.b16 %v128, %v126
  %v147 = vpack.c.b16 %v129, %v127
  %v148 = vpack.c.b16 %v132, %v130
  %v149 = vpack.c.b16 %v133, %v131
  %v176 = vunpack.c.l.b16 %v68
  %v177 = vunpack.c.l.b16 %v69
  %v178 = vunpack.c.l.b16 %v70
  %v179 = vunpack.c.l.b16 %v71
  %v180 = vunpack.c.l.b16 %v72
  %v181 = vunpack.c.l.b16 %v73
  %v182 = vunpack.c.l.b16 %v74
  %v183 = vunpack.c.l.b16 %v75
  %v184 = vunpack.c.l.b16 %v76
  %v185 = vunpack.c.l.b16 %v77
  %v186 = vunpack.c.l.b16 %v78
  %v187 = vunpack.c.l.b16 %v79
  %v188 = vunpack.c.l.b16 %v80
  %v189 = vunpack.c.l.b16 %v81
  %v190 = vunpack.c.l.b16 %v82
  %v191 = vunpack.c.l.b16 %v83
  %v192 = vunpack.c.l.b16 %v84
  %v193 = vunpack.c.l.b16 %v85
  %v194 = vpack.c.b16 %v177, %v176
  %v195 = vpack.c.b16 %v179, %v178
  %v196 = vpack.c.b16 %v181, %v180
  %v197 = vpack.c.b16 %v183, %v182
  %v198 = vpack.c.b16 %v185, %v184
  %v199 = vpack.c.b16 %v187, %v186
  %v200 = vpack.c.b16 %v189, %v188
  %v201 = vpack.c.b16 %v191, %v190
  %v202 = vpack.c.b16 %v193, %v192
  %vm212 = vcmask 130048
  %v214 = vsel %vm212, %v135, 0
  %v217 = vsel %vm212, %v137, 0
  %v220 = vsel %vm212, %v139, 0
  %v223 = vsel %vm212, %v141, 0
  %v226 = vsel %vm212, %v143, 0
  %v229 = vsel %vm212, %v145, 0
  %v232 = vsel %vm212, %v147, 0
  %v235 = vsel %vm212, %v149, 0
  %237 = vmatprep.subr.bf16.mxu0 0
  %238 = vmatpush1.bf16.msra.mxu0 %v194
  %239 = vmatprep.subr.bf16.mxu0 0
  %240 = vmatpush1.bf16.msra.mxu0 %v195
  %241 = vmatprep.subr.bf16.mxu0 0
  %242 = vmatpush1.bf16.msra.mxu0 %v196
  %243 = vmatprep.subr.bf16.mxu0 0
  %244 = vmatpush1.bf16.msra.mxu0 %v197
  %245 = vmatprep.subr.bf16.mxu0 0
  %246 = vmatpush1.bf16.msra.mxu0 %v198
  %247 = vmatprep.subr.bf16.mxu0 0
  %248 = vmatpush1.bf16.msra.mxu0 %v199
  %249 = vmatprep.subr.bf16.mxu0 0
  %250 = vmatpush1.bf16.msra.mxu0 %v200
  %251 = vmatprep.subr.bf16.mxu0 0
  %252 = vmatpush1.bf16.msra.mxu0 %v201
  %253 = vmatprep.subr.bf16.mxu0 0
  %254 = vmatpush1.bf16.msra.mxu0 %v202
  %255 = vmatprep.subr.bf16.mxu0 0
  %256 = vmatpush1.bf16.msra.mxu0 0
  %257 = vmatprep.subr.bf16.mxu0 0
  %258 = vmatpush1.bf16.msra.mxu0 0
  %259 = vmatprep.subr.bf16.mxu0 0
  %260 = vmatpush1.bf16.msra.mxu0 0
  %261 = vmatprep.subr.bf16.mxu0 0
  %262 = vmatpush1.bf16.msra.mxu0 0
  %263 = vmatprep.subr.bf16.mxu0 0
  %264 = vmatpush1.bf16.msra.mxu0 0
  %265 = vmatprep.subr.bf16.mxu0 0
  %266 = vmatpush1.bf16.msra.mxu0 0
  %267 = vmatprep.subr.bf16.mxu0 0
  %268 = vmatpush1.bf16.msra.mxu0 0
  %269 = vmatprep.mubr.bf16.mxu0 %v214
  %270 = vmatmul.mubr.bf16.gmra.mrb[0].mxu0 %v134
  %v271 = vpop.f32.mrb[0].mxu0
  %v272 = vadd.f32 0.0, %v271
  %v273 = vpop.f32.mrb[0].mxu0
  %v274 = vpop.f32.mrb[0].mxu0
  %v275 = vadd.f32 0.0, %v274
  %v276 = vpop.f32.mrb[0].mxu0
  %277 = vmatprep.mubr.bf16.mxu0 %v217
  %278 = vmatmul.mubr.bf16.gmra.mrb[0].mxu0 %v136
  %v279 = vpop.f32.mrb[0].mxu0
  %v280 = vadd.f32 0.0, %v279
  %v281 = vpop.f32.mrb[0].mxu0
  %v282 = vpop.f32.mrb[0].mxu0
  %v283 = vadd.f32 0.0, %v282
  %v284 = vpop.f32.mrb[0].mxu0
  %285 = vmatprep.mubr.bf16.mxu0 %v220
  %286 = vmatmul.mubr.bf16.gmra.mrb[0].mxu0 %v138
  %v287 = vpop.f32.mrb[0].mxu0
  %v288 = vadd.f32 0.0, %v287
  %v289 = vpop.f32.mrb[0].mxu0
  %v290 = vpop.f32.mrb[0].mxu0
  %v291 = vadd.f32 0.0, %v290
  %v292 = vpop.f32.mrb[0].mxu0
  %293 = vmatprep.mubr.bf16.mxu0 %v223
  %294 = vmatmul.mubr.bf16.gmra.mrb[0].mxu0 %v140
  %v295 = vpop.f32.mrb[0].mxu0
  %v296 = vadd.f32 0.0, %v295
  %v297 = vpop.f32.mrb[0].mxu0
  %v298 = vpop.f32.mrb[0].mxu0
  %v299 = vadd.f32 0.0, %v298
  %v300 = vpop.f32.mrb[0].mxu0
  %301 = vmatprep.mubr.bf16.mxu0 %v226
  %302 = vmatmul.mubr.bf16.gmra.mrb[0].mxu0 %v142
  %v303 = vpop.f32.mrb[0].mxu0
  %v304 = vadd.f32 0.0, %v303
  %v305 = vpop.f32.mrb[0].mxu0
  %v306 = vpop.f32.mrb[0].mxu0
  %v307 = vadd.f32 0.0, %v306
  %v308 = vpop.f32.mrb[0].mxu0
  %309 = vmatprep.mubr.bf16.mxu0 %v229
  %310 = vmatmul.mubr.bf16.gmra.mrb[0].mxu0 %v144
  %v311 = vpop.f32.mrb[0].mxu0
  %v312 = vadd.f32 0.0, %v311
  %v313 = vpop.f32.mrb[0].mxu0
  %v314 = vpop.f32.mrb[0].mxu0
  %v315 = vadd.f32 0.0, %v314
  %v316 = vpop.f32.mrb[0].mxu0
  %317 = vmatprep.mubr.bf16.mxu0 %v232
  %318 = vmatmul.mubr.bf16.gmra.mrb[0].mxu0 %v146
  %v319 = vpop.f32.mrb[0].mxu0
  %v320 = vadd.f32 0.0, %v319
  %v321 = vpop.f32.mrb[0].mxu0
  %v322 = vpop.f32.mrb[0].mxu0
  %v323 = vadd.f32 0.0, %v322
  %v324 = vpop.f32.mrb[0].mxu0
  %325 = vmatprep.mubr.bf16.mxu0 %v235
  %326 = vmatmul.mubr.bf16.gmra.mrb[0].mxu0 %v148
  %v327 = vpop.f32.mrb[0].mxu0
  %v328 = vadd.f32 0.0, %v327
  %v329 = vpop.f32.mrb[0].mxu0
  %v330 = vpop.f32.mrb[0].mxu0
  %v331 = vadd.f32 0.0, %v330
  %v332 = vpop.f32.mrb[0].mxu0
  %333 = vdwg.mxu0
  %v334 = vadd.f32 %v36, %v272
  %v335 = vadd.f32 %v37, %v275
  %v336 = vadd.f32 %v38, %v280
  %v337 = vadd.f32 %v39, %v283
  %v338 = vadd.f32 %v40, %v288
  %v339 = vadd.f32 %v41, %v291
  %v340 = vadd.f32 %v42, %v296
  %v341 = vadd.f32 %v43, %v299
  %v342 = vadd.f32 %v44, %v304
  %v343 = vadd.f32 %v45, %v307
  %v344 = vadd.f32 %v46, %v312
  %v345 = vadd.f32 %v47, %v315
  %v346 = vadd.f32 %v48, %v320
  %v347 = vadd.f32 %v49, %v323
  %v348 = vadd.f32 %v50, %v328
  %v349 = vadd.f32 %v51, %v331
  %vm350 = vcmask 31744
  %351 = vst.msk [vmem:[#allocation2] sm:$0xff] %vm350, %v334
  %352 = vst.msk [vmem:[#allocation2 + $0x8] sm:$0xff] %vm350, %v335
  %353 = vst.msk [vmem:[#allocation2 + $0x10] sm:$0xff] %vm350, %v336
  %354 = vst.msk [vmem:[#allocation2 + $0x18] sm:$0xff] %vm350, %v337
  %355 = vst.msk [vmem:[#allocation2 + $0x20] sm:$0xff] %vm350, %v338
  %356 = vst.msk [vmem:[#allocation2 + $0x28] sm:$0xff] %vm350, %v339
  %357 = vst.msk [vmem:[#allocation2 + $0x30] sm:$0xff] %vm350, %v340
  %358 = vst.msk [vmem:[#allocation2 + $0x38] sm:$0xff] %vm350, %v341
  %359 = vst.msk [vmem:[#allocation2 + $0x40] sm:$0xff] %vm350, %v342
  %360 = vst.msk [vmem:[#allocation2 + $0x48] sm:$0xff] %vm350, %v343
  %361 = vst.msk [vmem:[#allocation2 + $0x50] sm:$0xff] %vm350, %v344
  %362 = vst.msk [vmem:[#allocation2 + $0x58] sm:$0xff] %vm350, %v345
  %363 = vst.msk [vmem:[#allocation2 + $0x60] sm:$0xff] %vm350, %v346
  %364 = vst.msk [vmem:[#allocation2 + $0x68] sm:$0xff] %vm350, %v347
  %365 = vst.msk [vmem:[#allocation2 + $0x70] sm:$0xff] %vm350, %v348
  %366 = vst.msk [vmem:[#allocation2 + $0x78] sm:$0xff] %vm350, %v349
  // Predicated region
  $region18: #{conv_vae_forward.11} parent=0 // pred_check
    %p367 = pneg %p15
  $region19: #{conv_vae_forward.11} parent=0 // pred_check_branch
    %369 = sbr.rel (%p367) target = $region21
  $region20: #{conv_vae_forward.11} parent=0 // pred_region
    %v370 = vld [vmem:[#allocation2] sm:$0xff]
    %v371 = vld [vmem:[#allocation2 + $0x8] sm:$0xff]
    %v372 = vld [vmem:[#allocation2 + $0x10] sm:$0xff]
    %v373 = vld [vmem:[#allocation2 + $0x18] sm:$0xff]
    %v374 = vld [vmem:[#allocation2 + $0x20] sm:$0xff]
    %v375 = vld [vmem:[#allocation2 + $0x28] sm:$0xff]
    %v376 = vld [vmem:[#allocation2 + $0x30] sm:$0xff]
    %v377 = vld [vmem:[#allocation2 + $0x38] sm:$0xff]
    %v378 = vld [vmem:[#allocation2 + $0x40] sm:$0xff]
    %v379 = vld [vmem:[#allocation2 + $0x48] sm:$0xff]
    %v380 = vld [vmem:[#allocation2 + $0x50] sm:$0xff]
    %v381 = vld [vmem:[#allocation2 + $0x58] sm:$0xff]
    %v382 = vld [vmem:[#allocation2 + $0x60] sm:$0xff]
    %v383 = vld [vmem:[#allocation2 + $0x68] sm:$0xff]
    %v384 = vld [vmem:[#allocation2 + $0x70] sm:$0xff]
    %v385 = vld [vmem:[#allocation2 + $0x78] sm:$0xff]
    %v386 = vld [vmem:[%s2] sm:$0x1]
    %v388 = vlaneseq
    %v389 = vshrl.u32 %v388, 7
    %v390 = vsub.s32 0, %v389
    %v391 = vrot.slane %v386, %v390
    %v393 = vadd.f32 %v370, %v391
    %v394 = vadd.f32 %v371, %v391
    %v395 = vadd.f32 %v372, %v391
    %v396 = vadd.f32 %v373, %v391
    %v397 = vadd.f32 %v374, %v391
    %v398 = vadd.f32 %v375, %v391
    %v399 = vadd.f32 %v376, %v391
    %v400 = vadd.f32 %v377, %v391
    %v401 = vadd.f32 %v378, %v391
    %v402 = vadd.f32 %v379, %v391
    %v403 = vadd.f32 %v380, %v391
    %v404 = vadd.f32 %v381, %v391
    %v405 = vadd.f32 %v382, %v391
    %v406 = vadd.f32 %v383, %v391
    %v407 = vadd.f32 %v384, %v391
    %v408 = vadd.f32 %v385, %v391
    %v409 = vxor.u32 %v393, 2147483648
    %v410 = vxor.u32 %v394, 2147483648
    %v411 = vxor.u32 %v395, 2147483648
    %v412 = vxor.u32 %v396, 2147483648
    %v413 = vxor.u32 %v397, 2147483648
    %v414 = vxor.u32 %v398, 2147483648
    %v415 = vxor.u32 %v399, 2147483648
    %v416 = vxor.u32 %v400, 2147483648
    %v417 = vxor.u32 %v401, 2147483648
    %v418 = vxor.u32 %v402, 2147483648
    %v419 = vxor.u32 %v403, 2147483648
    %v420 = vxor.u32 %v404, 2147483648
    %v421 = vxor.u32 %v405, 2147483648
    %v422 = vxor.u32 %v406, 2147483648
    %v423 = vxor.u32 %v407, 2147483648
    %v424 = vxor.u32 %v408, 2147483648
    %v425 = vmul.f32 %v409, 1.442695
    %v426 = vpow.pop %v425
    %v427 = vmul.f32 %v410, 1.442695
    %v428 = vpow.pop %v427
    %v429 = vmul.f32 %v411, 1.442695
    %v430 = vpow.pop %v429
    %v431 = vmul.f32 %v412, 1.442695
    %v432 = vpow.pop %v431
    %v433 = vmul.f32 %v413, 1.442695
    %v434 = vpow.pop %v433
    %v435 = vmul.f32 %v414, 1.442695
    %v436 = vpow.pop %v435
    %v437 = vmul.f32 %v415, 1.442695
    %v438 = vpow.pop %v437
    %v439 = vmul.f32 %v416, 1.442695
    %v440 = vpow.pop %v439
    %v441 = vmul.f32 %v417, 1.442695
    %v442 = vpow.pop %v441
    %v443 = vmul.f32 %v418, 1.442695
    %v444 = vpow.pop %v443
    %v445 = vmul.f32 %v419, 1.442695
    %v446 = vpow.pop %v445
    %v447 = vmul.f32 %v420, 1.442695
    %v448 = vpow.pop %v447
    %v449 = vmul.f32 %v421, 1.442695
    %v450 = vpow.pop %v449
    %v451 = vmul.f32 %v422, 1.442695
    %v452 = vpow.pop %v451
    %v453 = vmul.f32 %v423, 1.442695
    %v454 = vpow.pop %v453
    %v455 = vmul.f32 %v424, 1.442695
    %v456 = vpow.pop %v455
    %v457 = vadd.f32 %v426, 1.0
    %v458 = vadd.f32 %v428, 1.0
    %v459 = vadd.f32 %v430, 1.0
    %v460 = vadd.f32 %v432, 1.0
    %v461 = vadd.f32 %v434, 1.0
    %v462 = vadd.f32 %v436, 1.0
    %v463 = vadd.f32 %v438, 1.0
    %v464 = vadd.f32 %v440, 1.0
    %v465 = vadd.f32 %v442, 1.0
    %v466 = vadd.f32 %v444, 1.0
    %v467 = vadd.f32 %v446, 1.0
    %v468 = vadd.f32 %v448, 1.0
    %v469 = vadd.f32 %v450, 1.0
    %v470 = vadd.f32 %v452, 1.0
    %v471 = vadd.f32 %v454, 1.0
    %v472 = vadd.f32 %v456, 1.0
    %v473 = vrcp.pop %v457
    %v474 = vmul.f32 1.0, %v473
    %v475 = vrcp.pop %v458
    %v476 = vmul.f32 1.0, %v475
    %v477 = vrcp.pop %v459
    %v478 = vmul.f32 1.0, %v477
    %v479 = vrcp.pop %v460
    %v480 = vmul.f32 1.0, %v479
    %v481 = vrcp.pop %v461
    %v482 = vmul.f32 1.0, %v481
    %v483 = vrcp.pop %v462
    %v484 = vmul.f32 1.0, %v483
    %v485 = vrcp.pop %v463
    %v486 = vmul.f32 1.0, %v485
    %v487 = vrcp.pop %v464
    %v488 = vmul.f32 1.0, %v487
    %v489 = vrcp.pop %v465
    %v490 = vmul.f32 1.0, %v489
    %v491 = vrcp.pop %v466
    %v492 = vmul.f32 1.0, %v491
    %v493 = vrcp.pop %v467
    %v494 = vmul.f32 1.0, %v493
    %v495 = vrcp.pop %v468
    %v496 = vmul.f32 1.0, %v495
    %v497 = vrcp.pop %v469
    %v498 = vmul.f32 1.0, %v497
    %v499 = vrcp.pop %v470
    %v500 = vmul.f32 1.0, %v499
    %v501 = vrcp.pop %v471
    %v502 = vmul.f32 1.0, %v501
    %v503 = vrcp.pop %v472
    %v504 = vmul.f32 1.0, %v503
    %505 = vst.msk [vmem:[%s3] sm:$0xff] %vm350, %v474
    %506 = vst.msk [vmem:[%s3 + $0x8] sm:$0xff] %vm350, %v476
    %507 = vst.msk [vmem:[%s3 + $0x10] sm:$0xff] %vm350, %v478
    %508 = vst.msk [vmem:[%s3 + $0x18] sm:$0xff] %vm350, %v480
    %509 = vst.msk [vmem:[%s3 + $0x20] sm:$0xff] %vm350, %v482
    %510 = vst.msk [vmem:[%s3 + $0x28] sm:$0xff] %vm350, %v484
    %511 = vst.msk [vmem:[%s3 + $0x30] sm:$0xff] %vm350, %v486
    %512 = vst.msk [vmem:[%s3 + $0x38] sm:$0xff] %vm350, %v488
    %513 = vst.msk [vmem:[%s3 + $0x40] sm:$0xff] %vm350, %v490
    %514 = vst.msk [vmem:[%s3 + $0x48] sm:$0xff] %vm350, %v492
    %515 = vst.msk [vmem:[%s3 + $0x50] sm:$0xff] %vm350, %v494
    %516 = vst.msk [vmem:[%s3 + $0x58] sm:$0xff] %vm350, %v496
    %517 = vst.msk [vmem:[%s3 + $0x60] sm:$0xff] %vm350, %v498
    %518 = vst.msk [vmem:[%s3 + $0x68] sm:$0xff] %vm350, %v500
    %519 = vst.msk [vmem:[%s3 + $0x70] sm:$0xff] %vm350, %v502
    %520 = vst.msk [vmem:[%s3 + $0x78] sm:$0xff] %vm350, %v504
  $region21: #{conv_vae_forward.11} parent=0 // pred_fallthru
    _
  // Predicated region
  $region22: #{conv_vae_forward.11} parent=0 // pred_check
    _
  $region23: #{conv_vae_forward.11} parent=0 // pred_check_branch
    %522 = sbr.rel (0) target = $region25
  $region24: #{conv_vae_forward.11} parent=0 // pred_region
    _
  $region25: #{conv_vae_forward.11} parent=0 // pred_fallthru
    _
  // Predicated region
  $region26: #{conv_vae_forward.11} parent=0 // pred_check
    _
  $region27: #{conv_vae_forward.11} parent=0 // pred_check_branch
    %524 = sbr.rel (0) target = $region29
  $region28: #{conv_vae_forward.11} parent=0 // pred_region
    _
  $region29: #{conv_vae_forward.11} parent=0 // pred_fallthru
    _

</llo_original>
